<compile_context>
chip_gen: v6e
topology: v6e:2x2x1
jax: 0.10.0
libtpu: 0.0.40
codegen_flags: <defaults>
</compile_context>

<pallas_src>
import functools
import math

import jax
import jax.numpy as jnp
from jax import lax
from jax.experimental import pallas as pl
from jax.experimental.pallas import tpu as pltpu

EPS = 1e-6


def encoder_kernel(x_ref, xmask_ref, reg_ref, amask_ref, t_ref,
                   wg_ref, bg_ref, wqkv_ref, bqkv_ref, wo_ref, bo_ref,
                   wff1_ref, bff1_ref, wff2_ref, bff2_ref,
                   o_ref, *, n_heads):
    # Per-batch shapes: x (T,C), x_mask (T,1), registers (R,C), attn_mask (T,S)
    # int8, t (1,E).  S = T + R.  Weights are (in, out) bf16; biases (1, out) f32.
    T, C = x_ref.shape
    Ff = wff2_ref.shape[0]
    dh = C // n_heads
    f32 = jnp.float32
    bf16 = jnp.bfloat16

    xmask = xmask_ref[...].astype(f32)            # (T, 1)
    x = x_ref[...].astype(f32) * xmask            # (T, C)  masked input (f32)
    regs = reg_ref[...].astype(f32)               # (R, C)
    t = t_ref[...].astype(bf16)                   # (1, E)  MXU operand

    # --- adaptive RMSNorm gammas: one fused (E, 3C) bf16 matmul, f32 acc ------
    g = jnp.dot(t, wg_ref[...], preferred_element_type=f32) + bg_ref[...]
    g1, g_reg, g2 = g[:, :C], g[:, C:2 * C], g[:, 2 * C:]          # (1, C) each

    def rms(v):                                   # f32 on VPU/EUP
        return v * lax.rsqrt(jnp.mean(v * v, axis=-1, keepdims=True) + EPS)

    attn_in = rms(x) * g1                         # (T, C)
    reg_n = rms(regs) * g_reg                     # (R, C)

    # --- attention: Q from x, K/V from [x ; registers]; fused QKV matmul ------
    ctx = jnp.concatenate([attn_in, reg_n], axis=0).astype(bf16)    # (S, C)
    qkv = jnp.dot(ctx, wqkv_ref[...],
                  preferred_element_type=f32) + bqkv_ref[...]       # (S, 3C) f32
    qb = qkv[:T, :C].astype(bf16)                 # only x rows produce queries
    kb = qkv[:, C:2 * C].astype(bf16)
    vb = qkv[:, 2 * C:].astype(bf16)

    scale = jnp.float32(1.0 / math.sqrt(dh))
    # mask bias built in-kernel from the int8 mask (hoisted out of head loop)
    valid = amask_ref[...].astype(jnp.int32) > 0                    # (T, S)
    bias = jnp.where(valid, jnp.float32(0.0), jnp.float32(-1e9))    # f32

    # wo folded into the head loop: accumulate straight into (T, C); no concat.
    attn = jnp.zeros((T, C), f32)
    for h in range(n_heads):                      # static unroll (n_heads small)
        qh = qb[:, h * dh:(h + 1) * dh]
        kh = kb[:, h * dh:(h + 1) * dh]
        vh = vb[:, h * dh:(h + 1) * dh]
        # q @ k^T without an explicit transpose; logits stay f32
        s = lax.dot_general(qh, kh, (((1,), (1,)), ((), ())),
                            preferred_element_type=f32) * scale + bias
        s = s - jnp.max(s, axis=-1, keepdims=True)
        p = jnp.exp(s)
        p = p * pl.reciprocal(jnp.sum(p, axis=-1, keepdims=True), approx=True)
        oh = jnp.dot(p.astype(bf16), vh, preferred_element_type=f32)   # (T, dh)
        attn = attn + jnp.dot(oh.astype(bf16), wo_ref[h * dh:(h + 1) * dh, :],
                              preferred_element_type=f32)
    attn = attn + bo_ref[...]

    x = x + attn                                  # residual 1

    # --- GLU FFN (kernel_size=1 -> pointwise); both halves in one matmul ------
    ff_in = rms(x) * g2
    hh = jnp.dot((ff_in * xmask).astype(bf16), wff1_ref[...],
                 preferred_element_type=f32) + bff1_ref[...]            # (T, 2F)
    hh = hh[:, :Ff] * jax.nn.sigmoid(hh[:, Ff:])                        # GLU, f32
    ffn = jnp.dot((hh * xmask).astype(bf16), wff2_ref[...],
                  preferred_element_type=f32) + bff2_ref[...]           # (T, C)

    o_ref[...] = ((x + ffn) * xmask).astype(o_ref.dtype)


def encoder_forward(x, x_mask, registers, attn_mask, t, params, n_heads):
    """x:(B,T,C) x_mask:(B,T,1) registers:(B,R,C) attn_mask:(B,T,T+R) t:(B,E)."""
    B, T, C = x.shape
    R = registers.shape[1]
    S = T + R
    E = t.shape[-1]
    assert C % n_heads == 0
    assert attn_mask.shape == (B, T, S)

    f32 = jnp.float32
    bf16 = jnp.bfloat16
    t3 = t.reshape(B, 1, E)
    # key/query validity only; ship as int8 (4x fewer mask DMA bytes vs f32)
    amask_i8 = (attn_mask > 0).astype(jnp.int8)

    # Weights as bf16 MXU operands; biases stay f32 (added to f32 accumulators).
    weights = [
        params["wg"].astype(bf16),   params["bg"].reshape(1, -1).astype(f32),
        params["wqkv"].astype(bf16), params["bqkv"].reshape(1, -1).astype(f32),
        params["wo"].astype(bf16),   params["bo"].reshape(1, -1).astype(f32),
        params["wff1"].astype(bf16), params["bff1"].reshape(1, -1).astype(f32),
        params["wff2"].astype(bf16), params["bff2"].reshape(1, -1).astype(f32),
    ]

    bmap = lambda b: (b, 0, 0)
    data_specs = [
        pl.BlockSpec((None, T, C), bmap),     # x          (caller dtype)
        pl.BlockSpec((None, T, 1), bmap),     # x_mask     (caller dtype)
        pl.BlockSpec((None, R, C), bmap),     # registers  (caller dtype)
        pl.BlockSpec((None, T, S), bmap),     # attn_mask  (int8)
        pl.BlockSpec((None, 1, E), bmap),     # t          (caller dtype)
    ]
    weight_specs = [pl.BlockSpec(w.shape, lambda b: (0, 0)) for w in weights]

    kernel = functools.partial(encoder_kernel, n_heads=n_heads)
    return pl.pallas_call(
        kernel,
        out_shape=jax.ShapeDtypeStruct((B, T, C), x.dtype),
        grid=(B,),
        in_specs=data_specs + weight_specs,
        out_specs=pl.BlockSpec((None, T, C), bmap),
        # Batches are independent: on v7x the two TensorCores split the grid;
        # no-op on v5e/v6e (single TC).
        compiler_params=pltpu.CompilerParams(dimension_semantics=("parallel",)),
    )(x, x_mask, registers, amask_i8, t3, *weights)


# ----------------------------- pure-JAX reference -----------------------------
def reference(x, x_mask, registers, attn_mask, t, p, n_heads):
    B, T, C = x.shape
    R = registers.shape[1]
    Ff = p["wff2"].shape[0]
    dh = C // n_heads

    def rms(v):
        return v * lax.rsqrt(jnp.mean(v * v, axis=-1, keepdims=True) + EPS)

    g = t @ p["wg"] + p["bg"]
    g1, g_reg, g2 = g[:, :C], g[:, C:2 * C], g[:, 2 * C:]

    xm = x * x_mask
    a_in = rms(xm) * g1[:, None, :]
    reg_n = rms(registers) * g_reg[:, None, :]

    ctx = jnp.concatenate([a_in, reg_n], axis=1)              # (B, S, C)
    qkv = ctx @ p["wqkv"] + p["bqkv"]                         # (B, S, 3C)
    S = T + R
    q = qkv[:, :T, :C].reshape(B, T, n_heads, dh)
    k = qkv[:, :, C:2 * C].reshape(B, S, n_heads, dh)
    v = qkv[:, :, 2 * C:].reshape(B, S, n_heads, dh)

    s = jnp.einsum("bthd,bshd->bhts", q, k) / math.sqrt(dh)
    s = s + jnp.where(attn_mask[:, None, :, :] > 0, 0.0, -1e9)
    pr = jax.nn.softmax(s, axis=-1)
    o = jnp.einsum("bhts,bshd->bthd", pr, v).reshape(B, T, C)
    attn = o @ p["wo"] + p["bo"]

    x1 = xm + attn
    ff_in = rms(x1) * g2[:, None, :]
    hh = (ff_in * x_mask) @ p["wff1"] + p["bff1"]
    hh = hh[..., :Ff] * jax.nn.sigmoid(hh[..., Ff:])
    ffn = (hh * x_mask) @ p["wff2"] + p["bff2"]
    return (x1 + ffn) * x_mask


def init_params(key, C, Ff, E):
    ks = jax.random.split(key, 10)

    def lin(k, fan_in, shape):
        lim = 1.0 / math.sqrt(fan_in)
        return jax.random.uniform(k, shape, jnp.float32, -lim, lim)

    return dict(
        wg=lin(ks[0], E, (E, 3 * C)),
        bg=1.0 + 0.1 * jax.random.normal(ks[1], (3 * C,), jnp.float32),  # gamma ~1
        wqkv=lin(ks[2], C, (C, 3 * C)),
        bqkv=lin(ks[3], C, (3 * C,)),
        wo=lin(ks[4], C, (C, C)),
        bo=lin(ks[5], C, (C,)),
        wff1=lin(ks[6], C, (C, 2 * Ff)),
        bff1=lin(ks[7], C, (2 * Ff,)),
        wff2=lin(ks[8], Ff, (Ff, C)),
        bff2=lin(ks[9], Ff, (C,)),
    )


if __name__ == "__main__":
    B, T, R = 2, 16, 8            # batch, sequence, register tokens
    C, Ff, E = 32, 64, 32         # hidden_channels, filter_channels, time_emb_dim
    n_heads = 4
    S = T + R

    key = jax.random.PRNGKey(0)
    k_p, k_x, k_r, k_t = jax.random.split(key, 4)
    params = init_params(k_p, C, Ff, E)

    x = jax.random.normal(k_x, (B, T, C), jnp.float32)
    registers = jax.random.normal(k_r, (B, R, C), jnp.float32)
    t_emb = jax.random.normal(k_t, (B, E), jnp.float32)

    # sequence mask: batch 0 full length, batch 1 has 3 padded frames
    lengths = jnp.array([T, T - 3])
    x_mask = (jnp.arange(T)[None, :] < lengths[:, None]).astype(jnp.float32)[..., None]
    # keys = [x frames (masked) ; register tokens (always visible)]
    key_valid = jnp.concatenate([x_mask[..., 0], jnp.ones((B, R), jnp.float32)], axis=1)
    attn_mask = (jnp.ones((B, T, 1), jnp.float32) * key_valid[:, None, :])   # (B,T,S)

    out = encoder_forward(x, x_mask, registers, attn_mask, t_emb, params, n_heads)
    out = jax.block_until_ready(out)

    with jax.default_matmul_precision("highest"):
        ref = reference(x, x_mask, registers, attn_mask, t_emb, params, n_heads)

    assert out.shape == (B, T, C)
    max_err = float(jnp.max(jnp.abs(out - ref)))
    # Tolerance accounts for bf16 MXU operands (f32 accumulation) + approx rcp;
    # real structural bugs would produce O(1) errors.
    assert jnp.allclose(out, ref, atol=5e-2, rtol=5e-2), \
        f"mismatch vs JAX reference (max|delta|={max_err})"

    print("KERNEL_OK")
</pallas_src>

<mosaic_0001>
module attributes {stable_mosaic.version = 11 : i64} {
  func.func @encoder_kernel(%arg0: i32, %arg1: memref<1x16x32xf32, #tpu.memory_space<vmem>>, %arg2: memref<1x16x1xf32, #tpu.memory_space<vmem>>, %arg3: memref<1x8x32xf32, #tpu.memory_space<vmem>>, %arg4: memref<1x16x24xi8, #tpu.memory_space<vmem>>, %arg5: memref<1x1x32xf32, #tpu.memory_space<vmem>>, %arg6: memref<32x96xbf16, #tpu.memory_space<vmem>>, %arg7: memref<1x96xf32, #tpu.memory_space<vmem>>, %arg8: memref<32x96xbf16, #tpu.memory_space<vmem>>, %arg9: memref<1x96xf32, #tpu.memory_space<vmem>>, %arg10: memref<32x32xbf16, #tpu.memory_space<vmem>>, %arg11: memref<1x32xf32, #tpu.memory_space<vmem>>, %arg12: memref<32x128xbf16, #tpu.memory_space<vmem>>, %arg13: memref<1x128xf32, #tpu.memory_space<vmem>>, %arg14: memref<64x32xbf16, #tpu.memory_space<vmem>>, %arg15: memref<1x32xf32, #tpu.memory_space<vmem>>, %arg16: memref<1x16x32xf32, #tpu.memory_space<vmem>>) attributes {dimension_semantics = [#tpu.dimension_semantics<parallel>], iteration_bounds = array<i64: 2>, scalar_prefetch = 0 : i64, scratch_operands = 0 : i64, tpu.core_type = #tpu.core_type<tc>, window_params = [{transform_indices = @transform_0, window_bounds = array<i64: 1, 16, 32>}, {transform_indices = @transform_1, window_bounds = array<i64: 1, 16, 1>}, {transform_indices = @transform_2, window_bounds = array<i64: 1, 8, 32>}, {transform_indices = @transform_3, window_bounds = array<i64: 1, 16, 24>}, {transform_indices = @transform_4, window_bounds = array<i64: 1, 1, 32>}, {pipeline_mode = #tpu.pipeline_mode<synchronous>, transform_indices = @transform_5, window_bounds = array<i64: 32, 96>}, {pipeline_mode = #tpu.pipeline_mode<synchronous>, transform_indices = @transform_6, window_bounds = array<i64: 1, 96>}, {pipeline_mode = #tpu.pipeline_mode<synchronous>, transform_indices = @transform_7, window_bounds = array<i64: 32, 96>}, {pipeline_mode = #tpu.pipeline_mode<synchronous>, transform_indices = @transform_8, window_bounds = array<i64: 1, 96>}, {pipeline_mode = #tpu.pipeline_mode<synchronous>, transform_indices = @transform_9, window_bounds = array<i64: 32, 32>}, {pipeline_mode = #tpu.pipeline_mode<synchronous>, transform_indices = @transform_10, window_bounds = array<i64: 1, 32>}, {pipeline_mode = #tpu.pipeline_mode<synchronous>, transform_indices = @transform_11, window_bounds = array<i64: 32, 128>}, {pipeline_mode = #tpu.pipeline_mode<synchronous>, transform_indices = @transform_12, window_bounds = array<i64: 1, 128>}, {pipeline_mode = #tpu.pipeline_mode<synchronous>, transform_indices = @transform_13, window_bounds = array<i64: 64, 32>}, {pipeline_mode = #tpu.pipeline_mode<synchronous>, transform_indices = @transform_14, window_bounds = array<i64: 1, 32>}, {transform_indices = @transform_15, window_bounds = array<i64: 1, 16, 32>}]} {
    %c0 = arith.constant 0 : index
    %c0_0 = arith.constant 0 : index
    %c0_1 = arith.constant 0 : index
    %0 = vector.load %arg2[%c0, %c0_0, %c0_1] : memref<1x16x1xf32, #tpu.memory_space<vmem>>, vector<1x16x1xf32>
    %1 = vector.shape_cast %0 : vector<1x16x1xf32> to vector<16x1xf32>
    %c0_2 = arith.constant 0 : index
    %c0_3 = arith.constant 0 : index
    %c0_4 = arith.constant 0 : index
    %2 = vector.load %arg1[%c0_2, %c0_3, %c0_4] : memref<1x16x32xf32, #tpu.memory_space<vmem>>, vector<1x16x32xf32>
    %3 = vector.shape_cast %2 : vector<1x16x32xf32> to vector<16x32xf32>
    %4 = vector.broadcast %1 : vector<16x1xf32> to vector<16x32xf32>
    %5 = arith.mulf %3, %4 : vector<16x32xf32>
    %c0_5 = arith.constant 0 : index
    %c0_6 = arith.constant 0 : index
    %c0_7 = arith.constant 0 : index
    %6 = vector.load %arg3[%c0_5, %c0_6, %c0_7] : memref<1x8x32xf32, #tpu.memory_space<vmem>>, vector<1x8x32xf32>
    %7 = vector.shape_cast %6 : vector<1x8x32xf32> to vector<8x32xf32>
    %c0_8 = arith.constant 0 : index
    %c0_9 = arith.constant 0 : index
    %c0_10 = arith.constant 0 : index
    %8 = vector.load %arg5[%c0_8, %c0_9, %c0_10] : memref<1x1x32xf32, #tpu.memory_space<vmem>>, vector<1x1x32xf32>
    %9 = vector.shape_cast %8 : vector<1x1x32xf32> to vector<1x32xf32>
    %10 = arith.truncf %9 : vector<1x32xf32> to vector<1x32xbf16>
    %c0_11 = arith.constant 0 : index
    %c0_12 = arith.constant 0 : index
    %11 = vector.load %arg6[%c0_11, %c0_12] : memref<32x96xbf16, #tpu.memory_space<vmem>>, vector<32x96xbf16>
    %cst = arith.constant dense<0.000000e+00> : vector<1x96xf32>
    %12 = tpu.matmul %10, %11, %cst {dimension_numbers = #tpu.dot_dimension_numbers<[1], [0], [0], [1], [0, 0, 1, 1], [], []>} : vector<1x32xbf16>, vector<32x96xbf16>, vector<1x96xf32> -> vector<1x96xf32>
    %c0_13 = arith.constant 0 : index
    %c0_14 = arith.constant 0 : index
    %13 = vector.load %arg7[%c0_13, %c0_14] : memref<1x96xf32, #tpu.memory_space<vmem>>, vector<1x96xf32>
    %14 = arith.addf %12, %13 : vector<1x96xf32>
    %15 = vector.extract_strided_slice %14 {offsets = [0, 0], sizes = [1, 32], strides = [1, 1]} : vector<1x96xf32> to vector<1x32xf32>
    %16 = vector.extract_strided_slice %14 {offsets = [0, 32], sizes = [1, 32], strides = [1, 1]} : vector<1x96xf32> to vector<1x32xf32>
    %17 = vector.extract_strided_slice %14 {offsets = [0, 64], sizes = [1, 32], strides = [1, 1]} : vector<1x96xf32> to vector<1x32xf32>
    %18 = arith.mulf %5, %5 : vector<16x32xf32>
    %cst_15 = arith.constant dense<0.000000e+00> : vector<16xf32>
    %19 = vector.multi_reduction <add>, %18, %cst_15 [1] : vector<16x32xf32> to vector<16xf32>
    %20 = vector.shape_cast %19 : vector<16xf32> to vector<16x1xf32>
    %cst_16 = arith.constant 3.200000e+01 : f32
    %21 = vector.broadcast %cst_16 : f32 to vector<16x1xf32>
    %22 = arith.divf %20, %21 : vector<16x1xf32>
    %cst_17 = arith.constant 9.99999997E-7 : f32
    %23 = vector.broadcast %cst_17 : f32 to vector<16x1xf32>
    %24 = arith.addf %22, %23 : vector<16x1xf32>
    %25 = math.rsqrt %24 : vector<16x1xf32>
    %26 = vector.broadcast %25 : vector<16x1xf32> to vector<16x32xf32>
    %27 = arith.mulf %5, %26 : vector<16x32xf32>
    %28 = vector.broadcast %15 : vector<1x32xf32> to vector<16x32xf32>
    %29 = arith.mulf %27, %28 : vector<16x32xf32>
    %30 = arith.mulf %7, %7 : vector<8x32xf32>
    %cst_18 = arith.constant dense<0.000000e+00> : vector<8xf32>
    %31 = vector.multi_reduction <add>, %30, %cst_18 [1] : vector<8x32xf32> to vector<8xf32>
    %32 = vector.shape_cast %31 : vector<8xf32> to vector<8x1xf32>
    %cst_19 = arith.constant 3.200000e+01 : f32
    %33 = vector.broadcast %cst_19 : f32 to vector<8x1xf32>
    %34 = arith.divf %32, %33 : vector<8x1xf32>
    %cst_20 = arith.constant 9.99999997E-7 : f32
    %35 = vector.broadcast %cst_20 : f32 to vector<8x1xf32>
    %36 = arith.addf %34, %35 : vector<8x1xf32>
    %37 = math.rsqrt %36 : vector<8x1xf32>
    %38 = vector.broadcast %37 : vector<8x1xf32> to vector<8x32xf32>
    %39 = arith.mulf %7, %38 : vector<8x32xf32>
    %40 = vector.broadcast %16 : vector<1x32xf32> to vector<8x32xf32>
    %41 = arith.mulf %39, %40 : vector<8x32xf32>
    %42 = tpu.concatenate %29, %41 in 0 : vector<16x32xf32>, vector<8x32xf32> -> vector<24x32xf32>
    %43 = arith.truncf %42 : vector<24x32xf32> to vector<24x32xbf16>
    %c0_21 = arith.constant 0 : index
    %c0_22 = arith.constant 0 : index
    %44 = vector.load %arg8[%c0_21, %c0_22] : memref<32x96xbf16, #tpu.memory_space<vmem>>, vector<32x96xbf16>
    %cst_23 = arith.constant dense<0.000000e+00> : vector<24x96xf32>
    %45 = tpu.matmul %43, %44, %cst_23 {dimension_numbers = #tpu.dot_dimension_numbers<[1], [0], [0], [1], [0, 0, 1, 1], [], []>} : vector<24x32xbf16>, vector<32x96xbf16>, vector<24x96xf32> -> vector<24x96xf32>
    %c0_24 = arith.constant 0 : index
    %c0_25 = arith.constant 0 : index
    %46 = vector.load %arg9[%c0_24, %c0_25] : memref<1x96xf32, #tpu.memory_space<vmem>>, vector<1x96xf32>
    %47 = vector.broadcast %46 : vector<1x96xf32> to vector<24x96xf32>
    %48 = arith.addf %45, %47 : vector<24x96xf32>
    %49 = vector.extract_strided_slice %48 {offsets = [0, 0], sizes = [16, 32], strides = [1, 1]} : vector<24x96xf32> to vector<16x32xf32>
    %50 = arith.truncf %49 : vector<16x32xf32> to vector<16x32xbf16>
    %51 = vector.extract_strided_slice %48 {offsets = [0, 32], sizes = [24, 32], strides = [1, 1]} : vector<24x96xf32> to vector<24x32xf32>
    %52 = arith.truncf %51 : vector<24x32xf32> to vector<24x32xbf16>
    %53 = vector.extract_strided_slice %48 {offsets = [0, 64], sizes = [24, 32], strides = [1, 1]} : vector<24x96xf32> to vector<24x32xf32>
    %54 = arith.truncf %53 : vector<24x32xf32> to vector<24x32xbf16>
    %c0_26 = arith.constant 0 : index
    %c0_27 = arith.constant 0 : index
    %c0_28 = arith.constant 0 : index
    %55 = vector.load %arg4[%c0_26, %c0_27, %c0_28] : memref<1x16x24xi8, #tpu.memory_space<vmem>>, vector<1x16x24xi8>
    %56 = vector.shape_cast %55 : vector<1x16x24xi8> to vector<16x24xi8>
    %57 = arith.extsi %56 : vector<16x24xi8> to vector<16x24xi32>
    %c0_i32 = arith.constant 0 : i32
    %58 = vector.broadcast %c0_i32 : i32 to vector<16x24xi32>
    %59 = arith.cmpi sgt, %57, %58 : vector<16x24xi32>
    %cst_29 = arith.constant 0.000000e+00 : f32
    %cst_30 = arith.constant -1.000000e+09 : f32
    %60 = vector.broadcast %cst_29 : f32 to vector<16x24xf32>
    %61 = vector.broadcast %cst_30 : f32 to vector<16x24xf32>
    %62 = arith.select %59, %60, %61 : vector<16x24xi1>, vector<16x24xf32>
    %cst_31 = arith.constant 0.000000e+00 : f32
    %63 = vector.broadcast %cst_31 : f32 to vector<16x32xf32>
    %64 = vector.extract_strided_slice %50 {offsets = [0, 0], sizes = [16, 8], strides = [1, 1]} : vector<16x32xbf16> to vector<16x8xbf16>
    %65 = vector.extract_strided_slice %52 {offsets = [0, 0], sizes = [24, 8], strides = [1, 1]} : vector<24x32xbf16> to vector<24x8xbf16>
    %66 = vector.extract_strided_slice %54 {offsets = [0, 0], sizes = [24, 8], strides = [1, 1]} : vector<24x32xbf16> to vector<24x8xbf16>
    %cst_32 = arith.constant dense<0.000000e+00> : vector<16x24xf32>
    %67 = tpu.matmul %64, %65, %cst_32 {dimension_numbers = #tpu.dot_dimension_numbers<[1], [1], [0], [0], [0, 0, 1, 0], [], []>} : vector<16x8xbf16>, vector<24x8xbf16>, vector<16x24xf32> -> vector<16x24xf32>
    %cst_33 = arith.constant 0.353553385 : f32
    %68 = vector.broadcast %cst_33 : f32 to vector<16x24xf32>
    %69 = arith.mulf %67, %68 : vector<16x24xf32>
    %70 = arith.addf %69, %62 : vector<16x24xf32>
    %cst_34 = arith.constant dense<0xFF800000> : vector<16xf32>
    %71 = vector.multi_reduction <maximumf>, %70, %cst_34 [1] : vector<16x24xf32> to vector<16xf32>
    %72 = vector.shape_cast %71 : vector<16xf32> to vector<16x1xf32>
    %73 = vector.broadcast %72 : vector<16x1xf32> to vector<16x24xf32>
    %74 = arith.subf %70, %73 : vector<16x24xf32>
    %75 = math.exp %74 : vector<16x24xf32>
    %cst_35 = arith.constant dense<0.000000e+00> : vector<16xf32>
    %76 = vector.multi_reduction <add>, %75, %cst_35 [1] : vector<16x24xf32> to vector<16xf32>
    %77 = vector.shape_cast %76 : vector<16xf32> to vector<16x1xf32>
    %78 = tpu.reciprocal %77 {approx = true} : vector<16x1xf32> -> vector<16x1xf32>
    %79 = vector.broadcast %78 : vector<16x1xf32> to vector<16x24xf32>
    %80 = arith.mulf %75, %79 : vector<16x24xf32>
    %81 = arith.truncf %80 : vector<16x24xf32> to vector<16x24xbf16>
    %cst_36 = arith.constant dense<0.000000e+00> : vector<16x8xf32>
    %82 = tpu.matmul %81, %66, %cst_36 {dimension_numbers = #tpu.dot_dimension_numbers<[1], [0], [0], [1], [0, 0, 1, 1], [], []>} : vector<16x24xbf16>, vector<24x8xbf16>, vector<16x8xf32> -> vector<16x8xf32>
    %83 = arith.truncf %82 : vector<16x8xf32> to vector<16x8xbf16>
    %c0_37 = arith.constant 0 : index
    %c0_38 = arith.constant 0 : index
    %84 = vector.load %arg10[%c0_37, %c0_38] : memref<32x32xbf16, #tpu.memory_space<vmem>>, vector<8x32xbf16>
    %cst_39 = arith.constant dense<0.000000e+00> : vector<16x32xf32>
    %85 = tpu.matmul %83, %84, %cst_39 {dimension_numbers = #tpu.dot_dimension_numbers<[1], [0], [0], [1], [0, 0, 1, 1], [], []>} : vector<16x8xbf16>, vector<8x32xbf16>, vector<16x32xf32> -> vector<16x32xf32>
    %86 = arith.addf %63, %85 : vector<16x32xf32>
    %87 = vector.extract_strided_slice %50 {offsets = [0, 8], sizes = [16, 8], strides = [1, 1]} : vector<16x32xbf16> to vector<16x8xbf16>
    %88 = vector.extract_strided_slice %52 {offsets = [0, 8], sizes = [24, 8], strides = [1, 1]} : vector<24x32xbf16> to vector<24x8xbf16>
    %89 = vector.extract_strided_slice %54 {offsets = [0, 8], sizes = [24, 8], strides = [1, 1]} : vector<24x32xbf16> to vector<24x8xbf16>
    %cst_40 = arith.constant dense<0.000000e+00> : vector<16x24xf32>
    %90 = tpu.matmul %87, %88, %cst_40 {dimension_numbers = #tpu.dot_dimension_numbers<[1], [1], [0], [0], [0, 0, 1, 0], [], []>} : vector<16x8xbf16>, vector<24x8xbf16>, vector<16x24xf32> -> vector<16x24xf32>
    %cst_41 = arith.constant 0.353553385 : f32
    %91 = vector.broadcast %cst_41 : f32 to vector<16x24xf32>
    %92 = arith.mulf %90, %91 : vector<16x24xf32>
    %93 = arith.addf %92, %62 : vector<16x24xf32>
    %cst_42 = arith.constant dense<0xFF800000> : vector<16xf32>
    %94 = vector.multi_reduction <maximumf>, %93, %cst_42 [1] : vector<16x24xf32> to vector<16xf32>
    %95 = vector.shape_cast %94 : vector<16xf32> to vector<16x1xf32>
    %96 = vector.broadcast %95 : vector<16x1xf32> to vector<16x24xf32>
    %97 = arith.subf %93, %96 : vector<16x24xf32>
    %98 = math.exp %97 : vector<16x24xf32>
    %cst_43 = arith.constant dense<0.000000e+00> : vector<16xf32>
    %99 = vector.multi_reduction <add>, %98, %cst_43 [1] : vector<16x24xf32> to vector<16xf32>
    %100 = vector.shape_cast %99 : vector<16xf32> to vector<16x1xf32>
    %101 = tpu.reciprocal %100 {approx = true} : vector<16x1xf32> -> vector<16x1xf32>
    %102 = vector.broadcast %101 : vector<16x1xf32> to vector<16x24xf32>
    %103 = arith.mulf %98, %102 : vector<16x24xf32>
    %104 = arith.truncf %103 : vector<16x24xf32> to vector<16x24xbf16>
    %cst_44 = arith.constant dense<0.000000e+00> : vector<16x8xf32>
    %105 = tpu.matmul %104, %89, %cst_44 {dimension_numbers = #tpu.dot_dimension_numbers<[1], [0], [0], [1], [0, 0, 1, 1], [], []>} : vector<16x24xbf16>, vector<24x8xbf16>, vector<16x8xf32> -> vector<16x8xf32>
    %106 = arith.truncf %105 : vector<16x8xf32> to vector<16x8xbf16>
    %c8 = arith.constant 8 : index
    %c0_45 = arith.constant 0 : index
    %107 = vector.load %arg10[%c8, %c0_45] : memref<32x32xbf16, #tpu.memory_space<vmem>>, vector<8x32xbf16>
    %cst_46 = arith.constant dense<0.000000e+00> : vector<16x32xf32>
    %108 = tpu.matmul %106, %107, %cst_46 {dimension_numbers = #tpu.dot_dimension_numbers<[1], [0], [0], [1], [0, 0, 1, 1], [], []>} : vector<16x8xbf16>, vector<8x32xbf16>, vector<16x32xf32> -> vector<16x32xf32>
    %109 = arith.addf %86, %108 : vector<16x32xf32>
    %110 = vector.extract_strided_slice %50 {offsets = [0, 16], sizes = [16, 8], strides = [1, 1]} : vector<16x32xbf16> to vector<16x8xbf16>
    %111 = vector.extract_strided_slice %52 {offsets = [0, 16], sizes = [24, 8], strides = [1, 1]} : vector<24x32xbf16> to vector<24x8xbf16>
    %112 = vector.extract_strided_slice %54 {offsets = [0, 16], sizes = [24, 8], strides = [1, 1]} : vector<24x32xbf16> to vector<24x8xbf16>
    %cst_47 = arith.constant dense<0.000000e+00> : vector<16x24xf32>
    %113 = tpu.matmul %110, %111, %cst_47 {dimension_numbers = #tpu.dot_dimension_numbers<[1], [1], [0], [0], [0, 0, 1, 0], [], []>} : vector<16x8xbf16>, vector<24x8xbf16>, vector<16x24xf32> -> vector<16x24xf32>
    %cst_48 = arith.constant 0.353553385 : f32
    %114 = vector.broadcast %cst_48 : f32 to vector<16x24xf32>
    %115 = arith.mulf %113, %114 : vector<16x24xf32>
    %116 = arith.addf %115, %62 : vector<16x24xf32>
    %cst_49 = arith.constant dense<0xFF800000> : vector<16xf32>
    %117 = vector.multi_reduction <maximumf>, %116, %cst_49 [1] : vector<16x24xf32> to vector<16xf32>
    %118 = vector.shape_cast %117 : vector<16xf32> to vector<16x1xf32>
    %119 = vector.broadcast %118 : vector<16x1xf32> to vector<16x24xf32>
    %120 = arith.subf %116, %119 : vector<16x24xf32>
    %121 = math.exp %120 : vector<16x24xf32>
    %cst_50 = arith.constant dense<0.000000e+00> : vector<16xf32>
    %122 = vector.multi_reduction <add>, %121, %cst_50 [1] : vector<16x24xf32> to vector<16xf32>
    %123 = vector.shape_cast %122 : vector<16xf32> to vector<16x1xf32>
    %124 = tpu.reciprocal %123 {approx = true} : vector<16x1xf32> -> vector<16x1xf32>
    %125 = vector.broadcast %124 : vector<16x1xf32> to vector<16x24xf32>
    %126 = arith.mulf %121, %125 : vector<16x24xf32>
    %127 = arith.truncf %126 : vector<16x24xf32> to vector<16x24xbf16>
    %cst_51 = arith.constant dense<0.000000e+00> : vector<16x8xf32>
    %128 = tpu.matmul %127, %112, %cst_51 {dimension_numbers = #tpu.dot_dimension_numbers<[1], [0], [0], [1], [0, 0, 1, 1], [], []>} : vector<16x24xbf16>, vector<24x8xbf16>, vector<16x8xf32> -> vector<16x8xf32>
    %129 = arith.truncf %128 : vector<16x8xf32> to vector<16x8xbf16>
    %c16 = arith.constant 16 : index
    %c0_52 = arith.constant 0 : index
    %130 = vector.load %arg10[%c16, %c0_52] : memref<32x32xbf16, #tpu.memory_space<vmem>>, vector<8x32xbf16>
    %cst_53 = arith.constant dense<0.000000e+00> : vector<16x32xf32>
    %131 = tpu.matmul %129, %130, %cst_53 {dimension_numbers = #tpu.dot_dimension_numbers<[1], [0], [0], [1], [0, 0, 1, 1], [], []>} : vector<16x8xbf16>, vector<8x32xbf16>, vector<16x32xf32> -> vector<16x32xf32>
    %132 = arith.addf %109, %131 : vector<16x32xf32>
    %133 = vector.extract_strided_slice %50 {offsets = [0, 24], sizes = [16, 8], strides = [1, 1]} : vector<16x32xbf16> to vector<16x8xbf16>
    %134 = vector.extract_strided_slice %52 {offsets = [0, 24], sizes = [24, 8], strides = [1, 1]} : vector<24x32xbf16> to vector<24x8xbf16>
    %135 = vector.extract_strided_slice %54 {offsets = [0, 24], sizes = [24, 8], strides = [1, 1]} : vector<24x32xbf16> to vector<24x8xbf16>
    %cst_54 = arith.constant dense<0.000000e+00> : vector<16x24xf32>
    %136 = tpu.matmul %133, %134, %cst_54 {dimension_numbers = #tpu.dot_dimension_numbers<[1], [1], [0], [0], [0, 0, 1, 0], [], []>} : vector<16x8xbf16>, vector<24x8xbf16>, vector<16x24xf32> -> vector<16x24xf32>
    %cst_55 = arith.constant 0.353553385 : f32
    %137 = vector.broadcast %cst_55 : f32 to vector<16x24xf32>
    %138 = arith.mulf %136, %137 : vector<16x24xf32>
    %139 = arith.addf %138, %62 : vector<16x24xf32>
    %cst_56 = arith.constant dense<0xFF800000> : vector<16xf32>
    %140 = vector.multi_reduction <maximumf>, %139, %cst_56 [1] : vector<16x24xf32> to vector<16xf32>
    %141 = vector.shape_cast %140 : vector<16xf32> to vector<16x1xf32>
    %142 = vector.broadcast %141 : vector<16x1xf32> to vector<16x24xf32>
    %143 = arith.subf %139, %142 : vector<16x24xf32>
    %144 = math.exp %143 : vector<16x24xf32>
    %cst_57 = arith.constant dense<0.000000e+00> : vector<16xf32>
    %145 = vector.multi_reduction <add>, %144, %cst_57 [1] : vector<16x24xf32> to vector<16xf32>
    %146 = vector.shape_cast %145 : vector<16xf32> to vector<16x1xf32>
    %147 = tpu.reciprocal %146 {approx = true} : vector<16x1xf32> -> vector<16x1xf32>
    %148 = vector.broadcast %147 : vector<16x1xf32> to vector<16x24xf32>
    %149 = arith.mulf %144, %148 : vector<16x24xf32>
    %150 = arith.truncf %149 : vector<16x24xf32> to vector<16x24xbf16>
    %cst_58 = arith.constant dense<0.000000e+00> : vector<16x8xf32>
    %151 = tpu.matmul %150, %135, %cst_58 {dimension_numbers = #tpu.dot_dimension_numbers<[1], [0], [0], [1], [0, 0, 1, 1], [], []>} : vector<16x24xbf16>, vector<24x8xbf16>, vector<16x8xf32> -> vector<16x8xf32>
    %152 = arith.truncf %151 : vector<16x8xf32> to vector<16x8xbf16>
    %c24 = arith.constant 24 : index
    %c0_59 = arith.constant 0 : index
    %153 = vector.load %arg10[%c24, %c0_59] : memref<32x32xbf16, #tpu.memory_space<vmem>>, vector<8x32xbf16>
    %cst_60 = arith.constant dense<0.000000e+00> : vector<16x32xf32>
    %154 = tpu.matmul %152, %153, %cst_60 {dimension_numbers = #tpu.dot_dimension_numbers<[1], [0], [0], [1], [0, 0, 1, 1], [], []>} : vector<16x8xbf16>, vector<8x32xbf16>, vector<16x32xf32> -> vector<16x32xf32>
    %155 = arith.addf %132, %154 : vector<16x32xf32>
    %c0_61 = arith.constant 0 : index
    %c0_62 = arith.constant 0 : index
    %156 = vector.load %arg11[%c0_61, %c0_62] : memref<1x32xf32, #tpu.memory_space<vmem>>, vector<1x32xf32>
    %157 = vector.broadcast %156 : vector<1x32xf32> to vector<16x32xf32>
    %158 = arith.addf %155, %157 : vector<16x32xf32>
    %159 = arith.addf %5, %158 : vector<16x32xf32>
    %160 = arith.mulf %159, %159 : vector<16x32xf32>
    %cst_63 = arith.constant dense<0.000000e+00> : vector<16xf32>
    %161 = vector.multi_reduction <add>, %160, %cst_63 [1] : vector<16x32xf32> to vector<16xf32>
    %162 = vector.shape_cast %161 : vector<16xf32> to vector<16x1xf32>
    %cst_64 = arith.constant 3.200000e+01 : f32
    %163 = vector.broadcast %cst_64 : f32 to vector<16x1xf32>
    %164 = arith.divf %162, %163 : vector<16x1xf32>
    %cst_65 = arith.constant 9.99999997E-7 : f32
    %165 = vector.broadcast %cst_65 : f32 to vector<16x1xf32>
    %166 = arith.addf %164, %165 : vector<16x1xf32>
    %167 = math.rsqrt %166 : vector<16x1xf32>
    %168 = vector.broadcast %167 : vector<16x1xf32> to vector<16x32xf32>
    %169 = arith.mulf %159, %168 : vector<16x32xf32>
    %170 = vector.broadcast %17 : vector<1x32xf32> to vector<16x32xf32>
    %171 = arith.mulf %169, %170 : vector<16x32xf32>
    %172 = vector.broadcast %1 : vector<16x1xf32> to vector<16x32xf32>
    %173 = arith.mulf %171, %172 : vector<16x32xf32>
    %174 = arith.truncf %173 : vector<16x32xf32> to vector<16x32xbf16>
    %c0_66 = arith.constant 0 : index
    %c0_67 = arith.constant 0 : index
    %175 = vector.load %arg12[%c0_66, %c0_67] : memref<32x128xbf16, #tpu.memory_space<vmem>>, vector<32x128xbf16>
    %cst_68 = arith.constant dense<0.000000e+00> : vector<16x128xf32>
    %176 = tpu.matmul %174, %175, %cst_68 {dimension_numbers = #tpu.dot_dimension_numbers<[1], [0], [0], [1], [0, 0, 1, 1], [], []>} : vector<16x32xbf16>, vector<32x128xbf16>, vector<16x128xf32> -> vector<16x128xf32>
    %c0_69 = arith.constant 0 : index
    %c0_70 = arith.constant 0 : index
    %177 = vector.load %arg13[%c0_69, %c0_70] : memref<1x128xf32, #tpu.memory_space<vmem>>, vector<1x128xf32>
    %178 = vector.broadcast %177 : vector<1x128xf32> to vector<16x128xf32>
    %179 = arith.addf %176, %178 : vector<16x128xf32>
    %180 = vector.extract_strided_slice %179 {offsets = [0, 0], sizes = [16, 64], strides = [1, 1]} : vector<16x128xf32> to vector<16x64xf32>
    %181 = vector.extract_strided_slice %179 {offsets = [0, 64], sizes = [16, 64], strides = [1, 1]} : vector<16x128xf32> to vector<16x64xf32>
    %182 = arith.negf %181 : vector<16x64xf32>
    %183 = math.exp %182 : vector<16x64xf32>
    %cst_71 = arith.constant 1.000000e+00 : f32
    %184 = vector.broadcast %cst_71 : f32 to vector<16x64xf32>
    %185 = arith.addf %184, %183 : vector<16x64xf32>
    %186 = arith.divf %184, %185 : vector<16x64xf32>
    %187 = arith.mulf %180, %186 : vector<16x64xf32>
    %188 = vector.broadcast %1 : vector<16x1xf32> to vector<16x64xf32>
    %189 = arith.mulf %187, %188 : vector<16x64xf32>
    %190 = arith.truncf %189 : vector<16x64xf32> to vector<16x64xbf16>
    %c0_72 = arith.constant 0 : index
    %c0_73 = arith.constant 0 : index
    %191 = vector.load %arg14[%c0_72, %c0_73] : memref<64x32xbf16, #tpu.memory_space<vmem>>, vector<64x32xbf16>
    %cst_74 = arith.constant dense<0.000000e+00> : vector<16x32xf32>
    %192 = tpu.matmul %190, %191, %cst_74 {dimension_numbers = #tpu.dot_dimension_numbers<[1], [0], [0], [1], [0, 0, 1, 1], [], []>} : vector<16x64xbf16>, vector<64x32xbf16>, vector<16x32xf32> -> vector<16x32xf32>
    %c0_75 = arith.constant 0 : index
    %c0_76 = arith.constant 0 : index
    %193 = vector.load %arg15[%c0_75, %c0_76] : memref<1x32xf32, #tpu.memory_space<vmem>>, vector<1x32xf32>
    %194 = vector.broadcast %193 : vector<1x32xf32> to vector<16x32xf32>
    %195 = arith.addf %192, %194 : vector<16x32xf32>
    %196 = arith.addf %159, %195 : vector<16x32xf32>
    %197 = vector.broadcast %1 : vector<16x1xf32> to vector<16x32xf32>
    %198 = arith.mulf %196, %197 : vector<16x32xf32>
    %c0_77 = arith.constant 0 : index
    %c0_78 = arith.constant 0 : index
    %c0_79 = arith.constant 0 : index
    %199 = vector.load %arg16[%c0_77, %c0_78, %c0_79] : memref<1x16x32xf32, #tpu.memory_space<vmem>>, vector<1x16x32xf32>
    %200 = vector.shape_cast %199 : vector<1x16x32xf32> to vector<16x32xf32>
    %201 = vector.shape_cast %198 : vector<16x32xf32> to vector<1x16x32xf32>
    tpu.vector_store %arg16[%c0_77, %c0_78, %c0_79], %201 {strides = array<i32>} : memref<1x16x32xf32, #tpu.memory_space<vmem>>, vector<1x16x32xf32>,
    return
  }
  func.func @transform_0(%arg0: i32) -> (i32, i32, i32) {
    %c0_i32 = arith.constant 0 : i32
    %c0_i32_0 = arith.constant 0 : i32
    %c0_i32_1 = arith.constant 0 : i32
    return %arg0, %c0_i32, %c0_i32_0 : i32, i32, i32
  }
  func.func @transform_1(%arg0: i32) -> (i32, i32, i32) {
    %c0_i32 = arith.constant 0 : i32
    %c0_i32_0 = arith.constant 0 : i32
    %c0_i32_1 = arith.constant 0 : i32
    return %arg0, %c0_i32, %c0_i32_0 : i32, i32, i32
  }
  func.func @transform_2(%arg0: i32) -> (i32, i32, i32) {
    %c0_i32 = arith.constant 0 : i32
    %c0_i32_0 = arith.constant 0 : i32
    %c0_i32_1 = arith.constant 0 : i32
    return %arg0, %c0_i32, %c0_i32_0 : i32, i32, i32
  }
  func.func @transform_3(%arg0: i32) -> (i32, i32, i32) {
    %c0_i32 = arith.constant 0 : i32
    %c0_i32_0 = arith.constant 0 : i32
    %c0_i32_1 = arith.constant 0 : i32
    return %arg0, %c0_i32, %c0_i32_0 : i32, i32, i32
  }
  func.func @transform_4(%arg0: i32) -> (i32, i32, i32) {
    %c0_i32 = arith.constant 0 : i32
    %c0_i32_0 = arith.constant 0 : i32
    %c0_i32_1 = arith.constant 0 : i32
    return %arg0, %c0_i32, %c0_i32_0 : i32, i32, i32
  }
  func.func @transform_5(%arg0: i32) -> (i32, i32) {
    %c0_i32 = arith.constant 0 : i32
    %c0_i32_0 = arith.constant 0 : i32
    %c0_i32_1 = arith.constant 0 : i32
    return %c0_i32, %c0_i32_0 : i32, i32
  }
  func.func @transform_6(%arg0: i32) -> (i32, i32) {
    %c0_i32 = arith.constant 0 : i32
    %c0_i32_0 = arith.constant 0 : i32
    %c0_i32_1 = arith.constant 0 : i32
    return %c0_i32, %c0_i32_0 : i32, i32
  }
  func.func @transform_7(%arg0: i32) -> (i32, i32) {
    %c0_i32 = arith.constant 0 : i32
    %c0_i32_0 = arith.constant 0 : i32
    %c0_i32_1 = arith.constant 0 : i32
    return %c0_i32, %c0_i32_0 : i32, i32
  }
  func.func @transform_8(%arg0: i32) -> (i32, i32) {
    %c0_i32 = arith.constant 0 : i32
    %c0_i32_0 = arith.constant 0 : i32
    %c0_i32_1 = arith.constant 0 : i32
    return %c0_i32, %c0_i32_0 : i32, i32
  }
  func.func @transform_9(%arg0: i32) -> (i32, i32) {
    %c0_i32 = arith.constant 0 : i32
    %c0_i32_0 = arith.constant 0 : i32
    %c0_i32_1 = arith.constant 0 : i32
    return %c0_i32, %c0_i32_0 : i32, i32
  }
  func.func @transform_10(%arg0: i32) -> (i32, i32) {
    %c0_i32 = arith.constant 0 : i32
    %c0_i32_0 = arith.constant 0 : i32
    %c0_i32_1 = arith.constant 0 : i32
    return %c0_i32, %c0_i32_0 : i32, i32
  }
  func.func @transform_11(%arg0: i32) -> (i32, i32) {
    %c0_i32 = arith.constant 0 : i32
    %c0_i32_0 = arith.constant 0 : i32
    %c0_i32_1 = arith.constant 0 : i32
    return %c0_i32, %c0_i32_0 : i32, i32
  }
  func.func @transform_12(%arg0: i32) -> (i32, i32) {
    %c0_i32 = arith.constant 0 : i32
    %c0_i32_0 = arith.constant 0 : i32
    %c0_i32_1 = arith.constant 0 : i32
    return %c0_i32, %c0_i32_0 : i32, i32
  }
  func.func @transform_13(%arg0: i32) -> (i32, i32) {
    %c0_i32 = arith.constant 0 : i32
    %c0_i32_0 = arith.constant 0 : i32
    %c0_i32_1 = arith.constant 0 : i32
    return %c0_i32, %c0_i32_0 : i32, i32
  }
  func.func @transform_14(%arg0: i32) -> (i32, i32) {
    %c0_i32 = arith.constant 0 : i32
    %c0_i32_0 = arith.constant 0 : i32
    %c0_i32_1 = arith.constant 0 : i32
    return %c0_i32, %c0_i32_0 : i32, i32
  }
  func.func @transform_15(%arg0: i32) -> (i32, i32, i32) {
    %c0_i32 = arith.constant 0 : i32
    %c0_i32_0 = arith.constant 0 : i32
    %c0_i32_1 = arith.constant 0 : i32
    return %arg0, %c0_i32, %c0_i32_0 : i32, i32, i32
  }
}

</mosaic_0001>

<llo_original>
// kernel: tpu_custom_call.1
$region0: #{tpu_custom_call.1}
  #allocation0 [shape = 'u32[]', space=smem, size = 0x4, offset = 0x4, fixed_abs, tag = 'smem constant byte address 0x4 - core index']
  #allocation1 [shape = 'u32[144,128]{1,0:T(1,128)}', space=vmem, size = 0x12000, scoped, tag = 'internal scratch']
  %s0 = inlined_call_operand.vmem [shape: f32[2,16,32], index: 0, kind: input, shape index: {}]
  %s1 = inlined_call_operand.vmem [shape: f32[2,16,1], index: 1, kind: input, shape index: {}]
  %s2 = inlined_call_operand.vmem [shape: f32[2,8,32], index: 2, kind: input, shape index: {}]
  %s3 = inlined_call_operand.hbm [shape: s8[2,16,24], index: 3, kind: input, shape index: {}]
  %s4 = inlined_call_operand.hbm [shape: f32[2,1,32], index: 4, kind: input, shape index: {}]
  %s5 = inlined_call_operand.vmem [shape: bf16[32,96], index: 5, kind: input, shape index: {}]
  %s6 = inlined_call_operand.hbm [shape: f32[1,96], index: 6, kind: input, shape index: {}]
  %s7 = inlined_call_operand.vmem [shape: bf16[32,96], index: 7, kind: input, shape index: {}]
  %s8 = inlined_call_operand.hbm [shape: f32[1,96], index: 8, kind: input, shape index: {}]
  %s9 = inlined_call_operand.vmem [shape: bf16[32,32], index: 9, kind: input, shape index: {}]
  %s10 = inlined_call_operand.vmem [shape: f32[1,32], index: 10, kind: input, shape index: {}]
  %s11 = inlined_call_operand.hbm [shape: bf16[32,128], index: 11, kind: input, shape index: {}]
  %s12 = inlined_call_operand.vmem [shape: f32[1,128], index: 12, kind: input, shape index: {}]
  %s13 = inlined_call_operand.vmem [shape: bf16[64,32], index: 13, kind: input, shape index: {}]
  %s14 = inlined_call_operand.vmem [shape: f32[1,32], index: 14, kind: input, shape index: {}]
  %s15 = inlined_call_operand.hbm [shape: f32[2,16,32], index: 15, kind: output, shape index: {}]
  %s16 = sld [smem:[#allocation0]]
  $region113: #{tpu_custom_call.1} parent=0
    _
  %s18 = ssub.s32 1, %s16
  %s19 = scalar_select 0, %s18, %s16
  $region1: #{tpu_custom_call.1} parent=0
    #allocation2 [shape = 'u8[4096]{0}', space=vmem, size = 0x1000, scoped, tag = 'input window, operand 3']
    #allocation3 [shape = 's32[2]{0}', space=sflag, size = 0x8, scoped, tag = 'scoped memory for tpu_custom_call.1']
    #allocation4 [shape = 's32[2]{0}', space=sflag, size = 0x8, scoped, tag = 'scoped memory for tpu_custom_call.1']
    #allocation5 [shape = 'u8[1024]{0}', space=vmem, size = 0x400, scoped, tag = 'input window, operand 4']
    #allocation6 [shape = 's32[2]{0}', space=sflag, size = 0x8, scoped, tag = 'scoped memory for tpu_custom_call.1']
    #allocation7 [shape = 'u8[512]{0}', space=vmem, size = 0x400, scoped, tag = 'input window, operand 6, single buffered']
    #allocation8 [shape = 'u8[512]{0}', space=vmem, size = 0x400, scoped, tag = 'input window, operand 8, single buffered']
    #allocation9 [shape = 's32[1]{0}', space=sflag, size = 0x4, scoped, tag = 'scoped memory for tpu_custom_call.1']
    #allocation10 [shape = 'u8[8192]{0}', space=vmem, size = 0x2000, scoped, tag = 'input window, operand 11, single buffered']
    #allocation11 [shape = 'u8[16384]{0}', space=vmem, size = 0x4000, scoped, tag = 'output window, operand 0']
    %20 = vsyncpa [#allocation3], 0
    %s21 = scalar_lea.sflag [#allocation3], 1
    %22 = vsyncpa %s21, 0
    %23 = vsyncpa [#allocation6], 0
    %s24 = scalar_lea.sflag [#allocation6], 1
    %25 = vsyncpa %s24, 0
    %26 = vsyncpa [#allocation9], 0
    %27 = vsyncpa [#allocation4], 0
    %s28 = scalar_lea.sflag [#allocation4], 1
    %29 = vsyncpa %s28, 0
    loop: start=0, step=1, limit=4
    $region2: #{tpu_custom_call.1} parent=1 // loop_pre_header
      _
    $region3: #{tpu_custom_call.1} parent=1 // loop_header
      %s31 = sphi 0, %s35
      %p32 = scmp.ge.s32.totalorder %s31, 4
      %s41 = sphi 0, %s43
      %s44 = sphi 0, %s41
      %s45 = sphi 0, %s44
      %s61 = sphi 0, %s45
      %s67 = sphi 0, %s69
      %s70 = sphi 0, %s67
      %s71 = sphi 0, %s70
      %s87 = sphi 0, %s71
      %s93 = sphi 0, %s95
      %s96 = sphi 0, %s93
      %s97 = sphi 0, %s96
      %s113 = sphi 0, %s97
      %s119 = sphi 0, %s121
      %s122 = sphi 0, %s119
      %s123 = sphi 0, %s122
      %s139 = sphi 0, %s123
      %s145 = sphi 0, %s147
      %s148 = sphi 0, %s145
      %s149 = sphi 0, %s148
      %s165 = sphi 0, %s149
      %s169 = sphi 0, %s169
      %s171 = sphi 0, %s169
      %s172 = sphi 0, %s171
      %s186 = sphi 0, %s172
      %s190 = sphi 0, %s190
      %s192 = sphi 0, %s190
      %s193 = sphi 0, %s192
      %s207 = sphi 0, %s193
      %s211 = sphi 0, %s211
      %s213 = sphi 0, %s211
      %s214 = sphi 0, %s213
      %s228 = sphi 0, %s214
      %s232 = sphi 0, %s232
      %s234 = sphi 0, %s232
      %s235 = sphi 0, %s234
      %s249 = sphi 0, %s235
      %s253 = sphi 0, %s253
      %s255 = sphi 0, %s253
      %s256 = sphi 0, %s255
      %s270 = sphi 0, %s256
      %s274 = sphi 0, %s274
      %s276 = sphi 0, %s274
      %s277 = sphi 0, %s276
      %s291 = sphi 0, %s277
      %s295 = sphi 0, %s295
      %s297 = sphi 0, %s295
      %s298 = sphi 0, %s297
      %s312 = sphi 0, %s298
      %s316 = sphi 0, %s316
      %s318 = sphi 0, %s316
      %s319 = sphi 0, %s318
      %s333 = sphi 0, %s319
      %s337 = sphi 0, %s337
      %s339 = sphi 0, %s337
      %s340 = sphi 0, %s339
      %s354 = sphi 0, %s340
      %s358 = sphi 0, %s358
      %s360 = sphi 0, %s358
      %s361 = sphi 0, %s360
      %s375 = sphi 0, %s361
      %s381 = sphi 0, %s383
      %s384 = sphi 0, %s381
      %s385 = sphi 0, %s384
      %s401 = sphi 0, %s385
    $region4: #{tpu_custom_call.1} parent=1 // loop_header_branch
      %34 = sbr.rel (%p32) target = $region8
    $region5: #{tpu_custom_call.1} parent=1 // loop_body
      %s36 = ssub.s32 %s31, 1
      %s37 = ssub.s32 %s31, 2
      %s38 = sadd.s32 %s31, 1
      %s39 = ssub.s32 %s31, %s38
      %p40 = scmp.eq.s32.totalorder %s39, 0
      %s42 = sadd.s32 %s41, 1
      %s43 = scalar_select %p40, %s41, %s42
      %p46 = pneg %p40
      %p47 = scmp.eq.s32.totalorder %s31, 1
      %p48 = por %p46, %p47
      %p49 = scmp.ne.s32.totalorder %s41, %s44
      %p50 = scmp.eq.s32.totalorder %s31, 0
      %p51 = por %p49, %p50
      %p52 = scmp.ne.s32.totalorder %s41, %s44
      %p53 = scmp.eq.s32.totalorder %s36, 1
      %p54 = por %p52, %p53
      %p55 = scmp.ne.s32.totalorder %s44, %s45
      %p56 = scmp.eq.s32.totalorder %s36, 0
      %p57 = por %p55, %p56
      %p58 = scmp.ne.s32.totalorder %s44, %s45
      %p59 = scmp.eq.s32.totalorder %s37, 1
      %p60 = por %p58, %p59
      %p62 = scmp.ne.s32.totalorder %s45, %s61
      %p63 = scmp.eq.s32.totalorder %s37, 0
      %p64 = por %p62, %p63
      %s65 = ssub.s32 %s31, %s38
      %p66 = scmp.eq.s32.totalorder %s65, 0
      %s68 = sadd.s32 %s67, 1
      %s69 = scalar_select %p66, %s67, %s68
      %p72 = pneg %p66
      %p73 = scmp.eq.s32.totalorder %s31, 1
      %p74 = por %p72, %p73
      %p75 = scmp.ne.s32.totalorder %s67, %s70
      %p76 = scmp.eq.s32.totalorder %s31, 0
      %p77 = por %p75, %p76
      %p78 = scmp.ne.s32.totalorder %s67, %s70
      %p79 = scmp.eq.s32.totalorder %s36, 1
      %p80 = por %p78, %p79
      %p81 = scmp.ne.s32.totalorder %s70, %s71
      %p82 = scmp.eq.s32.totalorder %s36, 0
      %p83 = por %p81, %p82
      %p84 = scmp.ne.s32.totalorder %s70, %s71
      %p85 = scmp.eq.s32.totalorder %s37, 1
      %p86 = por %p84, %p85
      %p88 = scmp.ne.s32.totalorder %s71, %s87
      %p89 = scmp.eq.s32.totalorder %s37, 0
      %p90 = por %p88, %p89
      %s91 = ssub.s32 %s31, %s38
      %p92 = scmp.eq.s32.totalorder %s91, 0
      %s94 = sadd.s32 %s93, 1
      %s95 = scalar_select %p92, %s93, %s94
      %p98 = pneg %p92
      %p99 = scmp.eq.s32.totalorder %s31, 1
      %p100 = por %p98, %p99
      %p101 = scmp.ne.s32.totalorder %s93, %s96
      %p102 = scmp.eq.s32.totalorder %s31, 0
      %p103 = por %p101, %p102
      %p104 = scmp.ne.s32.totalorder %s93, %s96
      %p105 = scmp.eq.s32.totalorder %s36, 1
      %p106 = por %p104, %p105
      %p107 = scmp.ne.s32.totalorder %s96, %s97
      %p108 = scmp.eq.s32.totalorder %s36, 0
      %p109 = por %p107, %p108
      %p110 = scmp.ne.s32.totalorder %s96, %s97
      %p111 = scmp.eq.s32.totalorder %s37, 1
      %p112 = por %p110, %p111
      %p114 = scmp.ne.s32.totalorder %s97, %s113
      %p115 = scmp.eq.s32.totalorder %s37, 0
      %p116 = por %p114, %p115
      %s117 = ssub.s32 %s31, %s38
      %p118 = scmp.eq.s32.totalorder %s117, 0
      %s120 = sadd.s32 %s119, 1
      %s121 = scalar_select %p118, %s119, %s120
      %p124 = pneg %p118
      %p125 = scmp.eq.s32.totalorder %s31, 1
      %p126 = por %p124, %p125
      %p127 = scmp.ne.s32.totalorder %s119, %s122
      %p128 = scmp.eq.s32.totalorder %s31, 0
      %p129 = por %p127, %p128
      %p130 = scmp.ne.s32.totalorder %s119, %s122
      %p131 = scmp.eq.s32.totalorder %s36, 1
      %p132 = por %p130, %p131
      %p133 = scmp.ne.s32.totalorder %s122, %s123
      %p134 = scmp.eq.s32.totalorder %s36, 0
      %p135 = por %p133, %p134
      %p136 = scmp.ne.s32.totalorder %s122, %s123
      %p137 = scmp.eq.s32.totalorder %s37, 1
      %p138 = por %p136, %p137
      %p140 = scmp.ne.s32.totalorder %s123, %s139
      %p141 = scmp.eq.s32.totalorder %s37, 0
      %p142 = por %p140, %p141
      %s143 = ssub.s32 %s31, %s38
      %p144 = scmp.eq.s32.totalorder %s143, 0
      %s146 = sadd.s32 %s145, 1
      %s147 = scalar_select %p144, %s145, %s146
      %p150 = pneg %p144
      %p151 = scmp.eq.s32.totalorder %s31, 1
      %p152 = por %p150, %p151
      %p153 = scmp.ne.s32.totalorder %s145, %s148
      %p154 = scmp.eq.s32.totalorder %s31, 0
      %p155 = por %p153, %p154
      %p156 = scmp.ne.s32.totalorder %s145, %s148
      %p157 = scmp.eq.s32.totalorder %s36, 1
      %p158 = por %p156, %p157
      %p159 = scmp.ne.s32.totalorder %s148, %s149
      %p160 = scmp.eq.s32.totalorder %s36, 0
      %p161 = por %p159, %p160
      %p162 = scmp.ne.s32.totalorder %s148, %s149
      %p163 = scmp.eq.s32.totalorder %s37, 1
      %p164 = por %p162, %p163
      %p166 = scmp.ne.s32.totalorder %s149, %s165
      %p167 = scmp.eq.s32.totalorder %s37, 0
      %p168 = por %p166, %p167
      %s170 = sadd.s32 %s169, 1
      %p173 = scmp.eq.s32.totalorder %s31, 1
      %p174 = scmp.ne.s32.totalorder %s169, %s171
      %p175 = scmp.eq.s32.totalorder %s31, 0
      %p176 = por %p174, %p175
      %p177 = scmp.ne.s32.totalorder %s169, %s171
      %p178 = scmp.eq.s32.totalorder %s36, 1
      %p179 = por %p177, %p178
      %p180 = scmp.ne.s32.totalorder %s171, %s172
      %p181 = scmp.eq.s32.totalorder %s36, 0
      %p182 = por %p180, %p181
      %p183 = scmp.ne.s32.totalorder %s171, %s172
      %p184 = scmp.eq.s32.totalorder %s37, 1
      %p185 = por %p183, %p184
      %p187 = scmp.ne.s32.totalorder %s172, %s186
      %p188 = scmp.eq.s32.totalorder %s37, 0
      %p189 = por %p187, %p188
      %s191 = sadd.s32 %s190, 1
      %p194 = scmp.eq.s32.totalorder %s31, 1
      %p195 = scmp.ne.s32.totalorder %s190, %s192
      %p196 = scmp.eq.s32.totalorder %s31, 0
      %p197 = por %p195, %p196
      %p198 = scmp.ne.s32.totalorder %s190, %s192
      %p199 = scmp.eq.s32.totalorder %s36, 1
      %p200 = por %p198, %p199
      %p201 = scmp.ne.s32.totalorder %s192, %s193
      %p202 = scmp.eq.s32.totalorder %s36, 0
      %p203 = por %p201, %p202
      %p204 = scmp.ne.s32.totalorder %s192, %s193
      %p205 = scmp.eq.s32.totalorder %s37, 1
      %p206 = por %p204, %p205
      %p208 = scmp.ne.s32.totalorder %s193, %s207
      %p209 = scmp.eq.s32.totalorder %s37, 0
      %p210 = por %p208, %p209
      %s212 = sadd.s32 %s211, 1
      %p215 = scmp.eq.s32.totalorder %s31, 1
      %p216 = scmp.ne.s32.totalorder %s211, %s213
      %p217 = scmp.eq.s32.totalorder %s31, 0
      %p218 = por %p216, %p217
      %p219 = scmp.ne.s32.totalorder %s211, %s213
      %p220 = scmp.eq.s32.totalorder %s36, 1
      %p221 = por %p219, %p220
      %p222 = scmp.ne.s32.totalorder %s213, %s214
      %p223 = scmp.eq.s32.totalorder %s36, 0
      %p224 = por %p222, %p223
      %p225 = scmp.ne.s32.totalorder %s213, %s214
      %p226 = scmp.eq.s32.totalorder %s37, 1
      %p227 = por %p225, %p226
      %p229 = scmp.ne.s32.totalorder %s214, %s228
      %p230 = scmp.eq.s32.totalorder %s37, 0
      %p231 = por %p229, %p230
      %s233 = sadd.s32 %s232, 1
      %p236 = scmp.eq.s32.totalorder %s31, 1
      %p237 = scmp.ne.s32.totalorder %s232, %s234
      %p238 = scmp.eq.s32.totalorder %s31, 0
      %p239 = por %p237, %p238
      %p240 = scmp.ne.s32.totalorder %s232, %s234
      %p241 = scmp.eq.s32.totalorder %s36, 1
      %p242 = por %p240, %p241
      %p243 = scmp.ne.s32.totalorder %s234, %s235
      %p244 = scmp.eq.s32.totalorder %s36, 0
      %p245 = por %p243, %p244
      %p246 = scmp.ne.s32.totalorder %s234, %s235
      %p247 = scmp.eq.s32.totalorder %s37, 1
      %p248 = por %p246, %p247
      %p250 = scmp.ne.s32.totalorder %s235, %s249
      %p251 = scmp.eq.s32.totalorder %s37, 0
      %p252 = por %p250, %p251
      %s254 = sadd.s32 %s253, 1
      %p257 = scmp.eq.s32.totalorder %s31, 1
      %p258 = scmp.ne.s32.totalorder %s253, %s255
      %p259 = scmp.eq.s32.totalorder %s31, 0
      %p260 = por %p258, %p259
      %p261 = scmp.ne.s32.totalorder %s253, %s255
      %p262 = scmp.eq.s32.totalorder %s36, 1
      %p263 = por %p261, %p262
      %p264 = scmp.ne.s32.totalorder %s255, %s256
      %p265 = scmp.eq.s32.totalorder %s36, 0
      %p266 = por %p264, %p265
      %p267 = scmp.ne.s32.totalorder %s255, %s256
      %p268 = scmp.eq.s32.totalorder %s37, 1
      %p269 = por %p267, %p268
      %p271 = scmp.ne.s32.totalorder %s256, %s270
      %p272 = scmp.eq.s32.totalorder %s37, 0
      %p273 = por %p271, %p272
      %s275 = sadd.s32 %s274, 1
      %p278 = scmp.eq.s32.totalorder %s31, 1
      %p279 = scmp.ne.s32.totalorder %s274, %s276
      %p280 = scmp.eq.s32.totalorder %s31, 0
      %p281 = por %p279, %p280
      %p282 = scmp.ne.s32.totalorder %s274, %s276
      %p283 = scmp.eq.s32.totalorder %s36, 1
      %p284 = por %p282, %p283
      %p285 = scmp.ne.s32.totalorder %s276, %s277
      %p286 = scmp.eq.s32.totalorder %s36, 0
      %p287 = por %p285, %p286
      %p288 = scmp.ne.s32.totalorder %s276, %s277
      %p289 = scmp.eq.s32.totalorder %s37, 1
      %p290 = por %p288, %p289
      %p292 = scmp.ne.s32.totalorder %s277, %s291
      %p293 = scmp.eq.s32.totalorder %s37, 0
      %p294 = por %p292, %p293
      %s296 = sadd.s32 %s295, 1
      %p299 = scmp.eq.s32.totalorder %s31, 1
      %p300 = scmp.ne.s32.totalorder %s295, %s297
      %p301 = scmp.eq.s32.totalorder %s31, 0
      %p302 = por %p300, %p301
      %p303 = scmp.ne.s32.totalorder %s295, %s297
      %p304 = scmp.eq.s32.totalorder %s36, 1
      %p305 = por %p303, %p304
      %p306 = scmp.ne.s32.totalorder %s297, %s298
      %p307 = scmp.eq.s32.totalorder %s36, 0
      %p308 = por %p306, %p307
      %p309 = scmp.ne.s32.totalorder %s297, %s298
      %p310 = scmp.eq.s32.totalorder %s37, 1
      %p311 = por %p309, %p310
      %p313 = scmp.ne.s32.totalorder %s298, %s312
      %p314 = scmp.eq.s32.totalorder %s37, 0
      %p315 = por %p313, %p314
      %s317 = sadd.s32 %s316, 1
      %p320 = scmp.eq.s32.totalorder %s31, 1
      %p321 = scmp.ne.s32.totalorder %s316, %s318
      %p322 = scmp.eq.s32.totalorder %s31, 0
      %p323 = por %p321, %p322
      %p324 = scmp.ne.s32.totalorder %s316, %s318
      %p325 = scmp.eq.s32.totalorder %s36, 1
      %p326 = por %p324, %p325
      %p327 = scmp.ne.s32.totalorder %s318, %s319
      %p328 = scmp.eq.s32.totalorder %s36, 0
      %p329 = por %p327, %p328
      %p330 = scmp.ne.s32.totalorder %s318, %s319
      %p331 = scmp.eq.s32.totalorder %s37, 1
      %p332 = por %p330, %p331
      %p334 = scmp.ne.s32.totalorder %s319, %s333
      %p335 = scmp.eq.s32.totalorder %s37, 0
      %p336 = por %p334, %p335
      %s338 = sadd.s32 %s337, 1
      %p341 = scmp.eq.s32.totalorder %s31, 1
      %p342 = scmp.ne.s32.totalorder %s337, %s339
      %p343 = scmp.eq.s32.totalorder %s31, 0
      %p344 = por %p342, %p343
      %p345 = scmp.ne.s32.totalorder %s337, %s339
      %p346 = scmp.eq.s32.totalorder %s36, 1
      %p347 = por %p345, %p346
      %p348 = scmp.ne.s32.totalorder %s339, %s340
      %p349 = scmp.eq.s32.totalorder %s36, 0
      %p350 = por %p348, %p349
      %p351 = scmp.ne.s32.totalorder %s339, %s340
      %p352 = scmp.eq.s32.totalorder %s37, 1
      %p353 = por %p351, %p352
      %p355 = scmp.ne.s32.totalorder %s340, %s354
      %p356 = scmp.eq.s32.totalorder %s37, 0
      %p357 = por %p355, %p356
      %s359 = sadd.s32 %s358, 1
      %p362 = scmp.eq.s32.totalorder %s31, 1
      %p363 = scmp.ne.s32.totalorder %s358, %s360
      %p364 = scmp.eq.s32.totalorder %s31, 0
      %p365 = por %p363, %p364
      %p366 = scmp.ne.s32.totalorder %s358, %s360
      %p367 = scmp.eq.s32.totalorder %s36, 1
      %p368 = por %p366, %p367
      %p369 = scmp.ne.s32.totalorder %s360, %s361
      %p370 = scmp.eq.s32.totalorder %s36, 0
      %p371 = por %p369, %p370
      %p372 = scmp.ne.s32.totalorder %s360, %s361
      %p373 = scmp.eq.s32.totalorder %s37, 1
      %p374 = por %p372, %p373
      %p376 = scmp.ne.s32.totalorder %s361, %s375
      %p377 = scmp.eq.s32.totalorder %s37, 0
      %p378 = por %p376, %p377
      %s379 = ssub.s32 %s31, %s38
      %p380 = scmp.eq.s32.totalorder %s379, 0
      %s382 = sadd.s32 %s381, 1
      %s383 = scalar_select %p380, %s381, %s382
      %p386 = pneg %p380
      %p387 = scmp.eq.s32.totalorder %s31, 1
      %p388 = por %p386, %p387
      %p389 = scmp.ne.s32.totalorder %s381, %s384
      %p390 = scmp.eq.s32.totalorder %s31, 0
      %p391 = por %p389, %p390
      %p392 = scmp.ne.s32.totalorder %s381, %s384
      %p393 = scmp.eq.s32.totalorder %s36, 1
      %p394 = por %p392, %p393
      %p395 = scmp.ne.s32.totalorder %s384, %s385
      %p396 = scmp.eq.s32.totalorder %s36, 0
      %p397 = por %p395, %p396
      %p398 = scmp.ne.s32.totalorder %s384, %s385
      %p399 = scmp.eq.s32.totalorder %s37, 1
      %p400 = por %p398, %p399
      %p402 = scmp.ne.s32.totalorder %s385, %s401
      %p403 = scmp.eq.s32.totalorder %s37, 0
      %p404 = por %p402, %p403
      %p405 = scmp.le.s32.totalorder 1, %s31
      %p406 = scmp.lt.s32.totalorder %s31, 3
      %p407 = pnand %p405, %p406
      %p408 = pneg %p407
      // Predicated region
      $region9: #{tpu_custom_call.1} parent=5 // pred_check
        _
      $region10: #{tpu_custom_call.1} parent=5 // pred_check_branch
        %410 = sbr.rel (%p407) target = $region12
      $region11: #{tpu_custom_call.1} parent=5 // pred_region
        %s411 = ssub.s32 %s31, 1
        // Predicated region
        $region13: #{tpu_custom_call.1} parent=11 // pred_check
          %p412 = pneg %p182
        $region14: #{tpu_custom_call.1} parent=11 // pred_check_branch
          %414 = sbr.rel (%p412) target = $region16
        $region15: #{tpu_custom_call.1} parent=11 // pred_region
          _
        $region16: #{tpu_custom_call.1} parent=11 // pred_fallthru
          _
        // Predicated region
        $region17: #{tpu_custom_call.1} parent=11 // pred_check
          %p415 = pneg %p203
        $region18: #{tpu_custom_call.1} parent=11 // pred_check_branch
          %417 = sbr.rel (%p415) target = $region20
        $region19: #{tpu_custom_call.1} parent=11 // pred_region
          %s419 = ssub.s32 16, 16
          %420 = vsyncadd [#allocation6], %s419
          %s422 = sshll.u32 [#allocation7], 4
          %s423 = int_to_ptr.vmem [resolvable:$true] %s422
          %425 = dma.hbm_to_vmem [thread:$0]  %s6, 16, %s423, [#allocation6]
        $region20: #{tpu_custom_call.1} parent=11 // pred_fallthru
          _
        // Predicated region
        $region21: #{tpu_custom_call.1} parent=11 // pred_check
          %p426 = pneg %p224
        $region22: #{tpu_custom_call.1} parent=11 // pred_check_branch
          %428 = sbr.rel (%p426) target = $region24
        $region23: #{tpu_custom_call.1} parent=11 // pred_region
          _
        $region24: #{tpu_custom_call.1} parent=11 // pred_fallthru
          _
        // Predicated region
        $region25: #{tpu_custom_call.1} parent=11 // pred_check
          %p429 = pneg %p245
        $region26: #{tpu_custom_call.1} parent=11 // pred_check_branch
          %431 = sbr.rel (%p429) target = $region28
        $region27: #{tpu_custom_call.1} parent=11 // pred_region
          %s433 = ssub.s32 16, 16
          %434 = vsyncadd [#allocation9], %s433
          %s436 = sshll.u32 [#allocation8], 4
          %s437 = int_to_ptr.vmem [resolvable:$true] %s436
          %439 = dma.hbm_to_vmem [thread:$0]  %s8, 16, %s437, [#allocation9]
        $region28: #{tpu_custom_call.1} parent=11 // pred_fallthru
          _
        // Predicated region
        $region29: #{tpu_custom_call.1} parent=11 // pred_check
          %p440 = pneg %p266
        $region30: #{tpu_custom_call.1} parent=11 // pred_check_branch
          %442 = sbr.rel (%p440) target = $region32
        $region31: #{tpu_custom_call.1} parent=11 // pred_region
          _
        $region32: #{tpu_custom_call.1} parent=11 // pred_fallthru
          _
        // Predicated region
        $region33: #{tpu_custom_call.1} parent=11 // pred_check
          %p443 = pneg %p287
        $region34: #{tpu_custom_call.1} parent=11 // pred_check_branch
          %445 = sbr.rel (%p443) target = $region36
        $region35: #{tpu_custom_call.1} parent=11 // pred_region
          _
        $region36: #{tpu_custom_call.1} parent=11 // pred_fallthru
          _
        // Predicated region
        $region37: #{tpu_custom_call.1} parent=11 // pred_check
          %p446 = pneg %p308
        $region38: #{tpu_custom_call.1} parent=11 // pred_check_branch
          %448 = sbr.rel (%p446) target = $region40
        $region39: #{tpu_custom_call.1} parent=11 // pred_region
          %s450 = ssub.s32 256, 256
          %451 = vsyncadd [#allocation9], %s450
          %s452 = sshll.u32 [#allocation10], 4
          %s453 = int_to_ptr.vmem [resolvable:$true] %s452
          %458 = dma.hbm_to_vmem [thread:$0]  %s11, 256, %s453, [#allocation9], 64, 64, 4
        $region40: #{tpu_custom_call.1} parent=11 // pred_fallthru
          _
        // Predicated region
        $region41: #{tpu_custom_call.1} parent=11 // pred_check
          %p459 = pneg %p329
        $region42: #{tpu_custom_call.1} parent=11 // pred_check_branch
          %461 = sbr.rel (%p459) target = $region44
        $region43: #{tpu_custom_call.1} parent=11 // pred_region
          _
        $region44: #{tpu_custom_call.1} parent=11 // pred_fallthru
          _
        // Predicated region
        $region45: #{tpu_custom_call.1} parent=11 // pred_check
          %p462 = pneg %p350
        $region46: #{tpu_custom_call.1} parent=11 // pred_check_branch
          %464 = sbr.rel (%p462) target = $region48
        $region47: #{tpu_custom_call.1} parent=11 // pred_region
          _
        $region48: #{tpu_custom_call.1} parent=11 // pred_fallthru
          _
        // Predicated region
        $region49: #{tpu_custom_call.1} parent=11 // pred_check
          %p465 = pneg %p371
        $region50: #{tpu_custom_call.1} parent=11 // pred_check_branch
          %467 = sbr.rel (%p465) target = $region52
        $region51: #{tpu_custom_call.1} parent=11 // pred_region
          _
        $region52: #{tpu_custom_call.1} parent=11 // pred_fallthru
          _
      $region12: #{tpu_custom_call.1} parent=5 // pred_fallthru
        _
      %p468 = scmp.lt.s32.totalorder %s31, 2
      // Predicated region
      $region53: #{tpu_custom_call.1} parent=5 // pred_check
        %p469 = pneg %p468
      $region54: #{tpu_custom_call.1} parent=5 // pred_check_branch
        %471 = sbr.rel (%p469) target = $region56
      $region55: #{tpu_custom_call.1} parent=5 // pred_region
        // Predicated region
        $region57: #{tpu_custom_call.1} parent=55 // pred_check
          %p472 = pneg %p51
        $region58: #{tpu_custom_call.1} parent=55 // pred_check_branch
          %474 = sbr.rel (%p472) target = $region60
        $region59: #{tpu_custom_call.1} parent=55 // pred_region
          %p475 = scmp.lt.s32.totalorder %s31, 1
          %s476 = scalar_select %p475, %s31, 1
          %s477 = smul.addr %s476, 2
          %s478 = smul.addr %s477, 8
          %s479 = scalar_lea.vmem %s0, %s478
        $region60: #{tpu_custom_call.1} parent=55 // pred_fallthru
          _
        // Predicated region
        $region61: #{tpu_custom_call.1} parent=55 // pred_check
          %p480 = pneg %p77
        $region62: #{tpu_custom_call.1} parent=55 // pred_check_branch
          %482 = sbr.rel (%p480) target = $region64
        $region63: #{tpu_custom_call.1} parent=55 // pred_region
          %p483 = scmp.lt.s32.totalorder %s31, 1
          %s484 = scalar_select %p483, %s31, 1
          %s485 = smul.addr %s484, 2
          %s486 = smul.addr %s485, 8
          %s487 = scalar_lea.vmem %s1, %s486
        $region64: #{tpu_custom_call.1} parent=55 // pred_fallthru
          _
        // Predicated region
        $region65: #{tpu_custom_call.1} parent=55 // pred_check
          %p488 = pneg %p103
        $region66: #{tpu_custom_call.1} parent=55 // pred_check_branch
          %490 = sbr.rel (%p488) target = $region68
        $region67: #{tpu_custom_call.1} parent=55 // pred_region
          %p491 = scmp.lt.s32.totalorder %s31, 1
          %s492 = scalar_select %p491, %s31, 1
          %s493 = smul.addr %s492, 8
          %s494 = scalar_lea.vmem %s2, %s493
        $region68: #{tpu_custom_call.1} parent=55 // pred_fallthru
          _
        // Predicated region
        $region69: #{tpu_custom_call.1} parent=55 // pred_check
          %p495 = pneg %p129
        $region70: #{tpu_custom_call.1} parent=55 // pred_check_branch
          %497 = sbr.rel (%p495) target = $region72
        $region71: #{tpu_custom_call.1} parent=55 // pred_region
          %s498 = sand.u32 %s119, 1
          %s499 = scalar_lea.sflag [#allocation3], %s498
          %s500 = sand.u32 %s119, 1
          %s501 = smul.addr %s500, 4
          %s502 = scalar_lea.vmem [#allocation2], %s501
          %s504 = ssub.s32 64, 64
          %505 = vsyncadd %s499, %s504
          %s506 = smul.addr %s31, 2
          %s507 = smul.addr %s506, 32
          %s508 = scalar_lea.hbm %s3, %s507
          %s509 = sshll.u32 %s502, 4
          %s510 = int_to_ptr.vmem [resolvable:$true] %s509
          %515 = dma.hbm_to_vmem [thread:$0]  %s508, 64, %s510, %s499, 32, 32, 2
        $region72: #{tpu_custom_call.1} parent=55 // pred_fallthru
          _
        // Predicated region
        $region73: #{tpu_custom_call.1} parent=55 // pred_check
          %p516 = pneg %p155
        $region74: #{tpu_custom_call.1} parent=55 // pred_check_branch
          %518 = sbr.rel (%p516) target = $region76
        $region75: #{tpu_custom_call.1} parent=55 // pred_region
          %s519 = sand.u32 %s31, 1
          %s520 = scalar_lea.sflag [#allocation6], %s519
          %s521 = sand.u32 %s145, 1
          %s522 = scalar_lea.vmem [#allocation5], %s521
          %s524 = ssub.s32 16, 16
          %525 = vsyncadd %s520, %s524
          %s526 = smul.addr %s31, 16
          %s527 = scalar_lea.hbm %s4, %s526
          %s529 = sshll.u32 %s522, 4
          %s530 = int_to_ptr.vmem [resolvable:$true] %s529
          %532 = dma.hbm_to_vmem [thread:$0]  %s527, 16, %s530, %s520
        $region76: #{tpu_custom_call.1} parent=55 // pred_fallthru
          _
      $region56: #{tpu_custom_call.1} parent=5 // pred_fallthru
        _
      %p533 = scmp.le.s32.totalorder 1, %s31
      %p534 = scmp.lt.s32.totalorder %s31, 3
      %p535 = pnand %p533, %p534
      %p536 = pneg %p535
      // Predicated region
      $region77: #{tpu_custom_call.1} parent=5 // pred_check
        _
      $region78: #{tpu_custom_call.1} parent=5 // pred_check_branch
        %538 = sbr.rel (%p535) target = $region80
      $region79: #{tpu_custom_call.1} parent=5 // pred_region
        %s539 = ssub.s32 %s31, 1
        %s540 = sand.u32 %s122, 1
        %s541 = scalar_lea.sflag [#allocation3], %s540
        %s542 = sand.u32 %s122, 1
        %s543 = smul.addr %s542, 4
        %s544 = scalar_lea.vmem [#allocation2], %s543
        // Predicated region
        $region81: #{tpu_custom_call.1} parent=79 // pred_check
          %p545 = pneg %p135
        $region82: #{tpu_custom_call.1} parent=79 // pred_check_branch
          %547 = sbr.rel (%p545) target = $region84
        $region83: #{tpu_custom_call.1} parent=79 // pred_region
          %548 = dma.done %s541, 64
        $region84: #{tpu_custom_call.1} parent=79 // pred_fallthru
          _
        %s549 = sand.u32 %s36, 1
        %s550 = scalar_lea.sflag [#allocation6], %s549
        %s551 = sand.u32 %s148, 1
        %s552 = scalar_lea.vmem [#allocation5], %s551
        // Predicated region
        $region85: #{tpu_custom_call.1} parent=79 // pred_check
          %p553 = pneg %p161
        $region86: #{tpu_custom_call.1} parent=79 // pred_check_branch
          %555 = sbr.rel (%p553) target = $region88
        $region87: #{tpu_custom_call.1} parent=79 // pred_region
          %556 = dma.done %s550, 16
        $region88: #{tpu_custom_call.1} parent=79 // pred_fallthru
          _
        // Predicated region
        $region89: #{tpu_custom_call.1} parent=79 // pred_check
          %p557 = pneg %p203
        $region90: #{tpu_custom_call.1} parent=79 // pred_check_branch
          %559 = sbr.rel (%p557) target = $region92
        $region91: #{tpu_custom_call.1} parent=79 // pred_region
          %560 = dma.done [#allocation6], 16
        $region92: #{tpu_custom_call.1} parent=79 // pred_fallthru
          _
        // Predicated region
        $region93: #{tpu_custom_call.1} parent=79 // pred_check
          %p561 = pneg %p245
        $region94: #{tpu_custom_call.1} parent=79 // pred_check_branch
          %563 = sbr.rel (%p561) target = $region96
        $region95: #{tpu_custom_call.1} parent=79 // pred_region
          %564 = dma.done [#allocation9], 16
        $region96: #{tpu_custom_call.1} parent=79 // pred_fallthru
          _
        // Predicated region
        $region97: #{tpu_custom_call.1} parent=79 // pred_check
          %p565 = pneg %p308
        $region98: #{tpu_custom_call.1} parent=79 // pred_check_branch
          %567 = sbr.rel (%p565) target = $region100
        $region99: #{tpu_custom_call.1} parent=79 // pred_region
          %568 = dma.done [#allocation9], 256
        $region100: #{tpu_custom_call.1} parent=79 // pred_fallthru
          _
        %p569 = scmp.lt.s32.totalorder %s36, 1
        %s570 = scalar_select %p569, %s36, 1
        %s571 = smul.addr %s570, 2
        %s572 = smul.addr %s571, 8
        %s573 = scalar_lea.vmem %s0, %s572
        %p574 = pneg %p57
        %p575 = pneg %p54
        %p576 = scmp.lt.s32.totalorder %s36, 1
        %s577 = scalar_select %p576, %s36, 1
        %s578 = smul.addr %s577, 2
        %s579 = smul.addr %s578, 8
        %s580 = scalar_lea.vmem %s1, %s579
        %p581 = pneg %p83
        %p582 = pneg %p80
        %p583 = scmp.lt.s32.totalorder %s36, 1
        %s584 = scalar_select %p583, %s36, 1
        %s585 = smul.addr %s584, 8
        %s586 = scalar_lea.vmem %s2, %s585
        %p587 = pneg %p109
        %p588 = pneg %p106
        %s589 = sand.u32 %s122, 1
        %s590 = scalar_lea.sflag [#allocation3], %s589
        %s591 = sand.u32 %s122, 1
        %s592 = smul.addr %s591, 4
        %s593 = scalar_lea.vmem [#allocation2], %s592
        %p594 = pneg %p135
        %p595 = pneg %p132
        %s596 = sand.u32 %s36, 1
        %s597 = scalar_lea.sflag [#allocation6], %s596
        %s598 = sand.u32 %s148, 1
        %s599 = scalar_lea.vmem [#allocation5], %s598
        %p600 = pneg %p161
        %p601 = pneg %p158
        %p602 = pneg %p182
        %p603 = pneg %p179
        %p604 = pneg %p203
        %p605 = pneg %p200
        %p606 = pneg %p224
        %p607 = pneg %p221
        %p608 = pneg %p245
        %p609 = pneg %p242
        %p610 = pneg %p266
        %p611 = pneg %p263
        %p612 = pneg %p287
        %p613 = pneg %p284
        %p614 = pneg %p308
        %p615 = pneg %p305
        %p616 = pneg %p329
        %p617 = pneg %p326
        %p618 = pneg %p350
        %p619 = pneg %p347
        %p620 = pneg %p371
        %p621 = pneg %p368
        %p622 = pneg %p397
        %p623 = pneg %p394
        %s624 = sand.u32 %s384, 1
        %s625 = scalar_lea.sflag [#allocation4], %s624
        %s626 = sand.u32 %s384, 1
        %s627 = smul.addr %s626, 16
        %s628 = scalar_lea.vmem [#allocation11], %s627
        %p629 = scmp.lt.s32.totalorder %s36, 1
        %s630 = scalar_select %p629, %s36, 1
        %s631 = smul.addr %s630, 2
        %s632 = smul.addr %s631, 8
        %s633 = scalar_lea.vmem %s0, %s632
        %p634 = scmp.lt.s32.totalorder %s36, 1
        %s635 = scalar_select %p634, %s36, 1
        %s636 = smul.addr %s635, 2
        %s637 = smul.addr %s636, 8
        %s638 = scalar_lea.vmem %s1, %s637
        %p639 = scmp.lt.s32.totalorder %s36, 1
        %s640 = scalar_select %p639, %s36, 1
        %s641 = smul.addr %s640, 8
        %s642 = scalar_lea.vmem %s2, %s641
        %v644 = vld [vmem:[%s638] sm:$0xff]
        %v645 = vld [vmem:[%s638 + $0x8] sm:$0xff]
        %v646 = vld [vmem:[%s633] sm:$0xff]
        %v647 = vld [vmem:[%s633 + $0x8] sm:$0xff]
        %649 = vset.pattern.permute.xlu0 0
        %650 = vperm.xlu0 %649, %v644
        %v651 = vpop.permute.xlu0 %650
        %654 = vset.pattern.permute.xlu0 0
        %655 = vperm.xlu0 %654, %v645
        %v656 = vpop.permute.xlu0 %655
        %v658 = vmul.f32 %v646, %v651
        %v659 = vmul.f32 %v647, %v656
        %v660 = vld [vmem:[%s642] sm:$0xff]
        %v661 = vld [vmem:[%s552] sm:$0x1]
        %v662 = vpack.c.bf16 %v661, %v661
        %v663 = vld [vmem:[%s5] sm:$0xf]
        %v664 = vld [vmem:[%s5 + $0x4] sm:$0xf]
        %v665 = vld [vmem:[%s5 + $0x8] sm:$0xf]
        %v666 = vld [vmem:[%s5 + $0xc] sm:$0xf]
        %v667 = vld [vmem:[#allocation7] sm:$0x1]
        %v672 = vunpack.c.l.b16 %v663
        %v673 = vunpack.c.l.b16 %v664
        %v674 = vunpack.c.l.b16 %v665
        %v675 = vunpack.c.l.b16 %v666
        %v676 = vpack.c.b16 %v673, %v672
        %v677 = vpack.c.b16 %v675, %v674
        %vm680 = vcmask 261120
        %v682 = vsel %vm680, %v662, 0
        %684 = vmatprep.subr.bf16.mxu0 0
        %685 = vmatpush1.bf16.msra.mxu0 0
        %686 = vmatprep.subr.bf16.mxu0 0
        %687 = vmatpush1.bf16.msra.mxu0 0
        %688 = vmatprep.subr.bf16.mxu0 0
        %689 = vmatpush1.bf16.msra.mxu0 0
        %690 = vmatprep.subr.bf16.mxu0 0
        %691 = vmatpush1.bf16.msra.mxu0 0
        %692 = vmatprep.subr.bf16.mxu0 0
        %693 = vmatpush1.bf16.msra.mxu0 0
        %694 = vmatprep.subr.bf16.mxu0 0
        %695 = vmatpush1.bf16.msra.mxu0 0
        %696 = vmatprep.subr.bf16.mxu0 0
        %697 = vmatpush1.bf16.msra.mxu0 %v677
        %698 = vmatprep.subr.bf16.mxu0 0
        %699 = vmatpush1.bf16.msra.mxu0 %v676
        %700 = vmatprep.subr.bf16.mxu0 0
        %701 = vmatpush2.bf16.msra.mxu0 0
        %702 = vmatprep.subr.bf16.mxu0 0
        %703 = vmatpush2.bf16.msra.mxu0 0
        %704 = vmatprep.subr.bf16.mxu0 0
        %705 = vmatpush2.bf16.msra.mxu0 0
        %706 = vmatprep.subr.bf16.mxu0 0
        %707 = vmatpush2.bf16.msra.mxu0 0
        %708 = vmatprep.subr.bf16.mxu0 0
        %709 = vmatpush2.bf16.msra.mxu0 0
        %710 = vmatprep.subr.bf16.mxu0 0
        %711 = vmatpush2.bf16.msra.mxu0 0
        %712 = vmatprep.subr.bf16.mxu0 0
        %713 = vmatpush2.bf16.msra.mxu0 0
        %714 = vmatprep.subr.bf16.mxu0 0
        %715 = vmatpush2.bf16.msra.mxu0 0
        %716 = vmatprep.mubr.bf16.mxu0 0
        %717 = vmatmul.mubr.bf16.gmra.mxu0 %v682
        %v718 = vpop.f32.mrf.mxu0
        %v719 = vadd.f32 %v667, %v718
        %v720 = vpop.f32.mrf.mxu0
        %v721 = vpop.f32.mrf.mxu0
        %v722 = vpop.f32.mrf.mxu0
        %723 = vdwg.mxu0
        %v724 = vmul.f32 %v658, %v658
        %v725 = vmul.f32 %v659, %v659
        %v726 = vsel %vm680, %v724, 0.0
        %727 = vadd.xlane.f32.xlu0 %v726
        %v728 = vpop.xlane.xlu0 %727
        %v729 = vsel %vm680, %v725, 0.0
        %730 = vadd.xlane.f32.xlu0 %v729
        %v731 = vpop.xlane.xlu0 %730
        %v732 = vrcp.pop 32.0
        %v733 = vmul.f32 %v728, %v732
        %v734 = vmul.f32 %v731, %v732
        %v735 = vadd.f32 %v733, 1e-06
        %v736 = vadd.f32 %v734, 1e-06
        %v737 = vrsqrt.pop %v735
        %v738 = vrsqrt.pop %v736
        %v739 = vmul.f32 %v658, %v737
        %v740 = vmul.f32 %v659, %v738
        %v741 = vlaneseq
        %v742 = vshrl.u32 %v741, 7
        %v743 = vsub.s32 0, %v742
        %v744 = vrot.slane %v719, %v743
        %v745 = vmul.f32 %v739, %v744
        %v746 = vmul.f32 %v740, %v744
        %v747 = vmul.f32 %v660, %v660
        %v748 = vsel %vm680, %v747, 0.0
        %749 = vadd.xlane.f32.xlu0 %v748
        %v750 = vpop.xlane.xlu0 %749
        %v751 = vmul.f32 %v750, %v732
        %v752 = vadd.f32 %v751, 1e-06
        %v753 = vrsqrt.pop %v752
        %v754 = vmul.f32 %v660, %v753
        %756 = vrot.lane.b32.xlu0 %v744, 96
        %v757 = vpop.permute.xlu0 %756
        %v759 = vmul.f32 %v754, %v757
        %v760 = vpack.c.bf16 %v746, %v745
        %v761 = vpack.c.bf16 %v759, %v759
        %v762 = vld [vmem:[%s7] sm:$0xf]
        %v763 = vld [vmem:[%s7 + $0x4] sm:$0xf]
        %v764 = vld [vmem:[%s7 + $0x8] sm:$0xf]
        %v765 = vld [vmem:[%s7 + $0xc] sm:$0xf]
        %v766 = vld [vmem:[#allocation8] sm:$0x1]
        %v768 = vlaneseq
        %v769 = vshrl.u32 %v768, 7
        %v770 = vsub.s32 0, %v769
        %v771 = vrot.slane %v766, %v770
        %v777 = vunpack.c.l.b16 %v762
        %v778 = vunpack.c.l.b16 %v763
        %v779 = vunpack.c.l.b16 %v764
        %v780 = vunpack.c.l.b16 %v765
        %v781 = vpack.c.b16 %v778, %v777
        %v782 = vpack.c.b16 %v780, %v779
        %v786 = vsel %vm680, %v760, 0
        %v789 = vsel %vm680, %v761, 0
        %791 = vmatprep.subr.bf16.mxu0 0
        %792 = vmatpush1.bf16.msra.mxu0 0
        %793 = vmatprep.subr.bf16.mxu0 0
        %794 = vmatpush1.bf16.msra.mxu0 0
        %795 = vmatprep.subr.bf16.mxu0 0
        %796 = vmatpush1.bf16.msra.mxu0 0
        %797 = vmatprep.subr.bf16.mxu0 0
        %798 = vmatpush1.bf16.msra.mxu0 0
        %799 = vmatprep.subr.bf16.mxu0 0
        %800 = vmatpush1.bf16.msra.mxu0 0
        %801 = vmatprep.subr.bf16.mxu0 0
        %802 = vmatpush1.bf16.msra.mxu0 0
        %803 = vmatprep.subr.bf16.mxu0 0
        %804 = vmatpush1.bf16.msra.mxu0 %v782
        %805 = vmatprep.subr.bf16.mxu0 0
        %806 = vmatpush1.bf16.msra.mxu0 %v781
        %807 = vmatprep.subr.bf16.mxu0 0
        %808 = vmatpush2.bf16.msra.mxu0 0
        %809 = vmatprep.subr.bf16.mxu0 0
        %810 = vmatpush2.bf16.msra.mxu0 0
        %811 = vmatprep.subr.bf16.mxu0 0
        %812 = vmatpush2.bf16.msra.mxu0 0
        %813 = vmatprep.subr.bf16.mxu0 0
        %814 = vmatpush2.bf16.msra.mxu0 0
        %815 = vmatprep.subr.bf16.mxu0 0
        %816 = vmatpush2.bf16.msra.mxu0 0
        %817 = vmatprep.subr.bf16.mxu0 0
        %818 = vmatpush2.bf16.msra.mxu0 0
        %819 = vmatprep.subr.bf16.mxu0 0
        %820 = vmatpush2.bf16.msra.mxu0 0
        %821 = vmatprep.subr.bf16.mxu0 0
        %822 = vmatpush2.bf16.msra.mxu0 0
        %823 = vmatprep.mubr.bf16.mxu0 0
        %824 = vmatmul.mubr.bf16.gmra.mxu0 %v786
        %v825 = vpop.f32.mrf.mxu0
        %v826 = vadd.f32 %v771, %v825
        %v827 = vpop.f32.mrf.mxu0
        %v828 = vpop.f32.mrf.mxu0
        %v829 = vadd.f32 %v771, %v828
        %v830 = vpop.f32.mrf.mxu0
        %831 = vmatprep.mubr.bf16.mxu0 0
        %832 = vmatmul.mubr.bf16.gmra.mxu0 %v789
        %v833 = vpop.f32.mrf.mxu0
        %v834 = vadd.f32 %v771, %v833
        %v835 = vpop.f32.mrf.mxu0
        %v836 = vpop.f32.mrf.mxu0
        %v837 = vpop.f32.mrf.mxu0
        %838 = vdwg.mxu0
        %v839 = vpack.c.bf16 %v829, %v826
        %v840 = vpack.c.bf16 %v834, %v834
        %v841 = vld [vmem:[%s544] sm:$0x3]
        %v842 = vld [vmem:[%s544 + $0x2] sm:$0x3]
        %v843 = vunpack.c.0.s8 %v841
        %v844 = vunpack.c.0.s8 %v842
        %vm845 = vcmp.gt.s32.totalorder %v843, 0
        %vm846 = vcmp.gt.s32.totalorder %v844, 0
        %v847 = vsel %vm845, 0.0, -1e+09
        %v848 = vsel %vm846, 0.0, -1e+09
        %851 = vrot.lane.b32.xlu0 %v839, 96
        %v852 = vpop.permute.xlu0 %851
        %853 = vrot.lane.b32.xlu0 %v840, 96
        %v854 = vpop.permute.xlu0 %853
        %vm855 = vcmask 64512
        %v857 = vsel %vm855, %v839, 0
        %v860 = vsel %vm855, %v852, 0
        %v863 = vsel %vm855, %v854, 0
        %865 = vmatprep.subr.bf16.mxu0 0
        %866 = vmatpush1.bf16.xpose.msra.mxu0 0
        %867 = vmatprep.subr.bf16.mxu0 0
        %868 = vmatpush1.bf16.xpose.msra.mxu0 0
        %869 = vmatprep.subr.bf16.mxu0 0
        %870 = vmatpush1.bf16.xpose.msra.mxu0 0
        %871 = vmatprep.subr.bf16.mxu0 0
        %872 = vmatpush1.bf16.xpose.msra.mxu0 0
        %873 = vmatprep.subr.bf16.mxu0 0
        %874 = vmatpush1.bf16.xpose.msra.mxu0 0
        %875 = vmatprep.subr.bf16.mxu0 0
        %876 = vmatpush1.bf16.xpose.msra.mxu0 0
        %877 = vmatprep.subr.bf16.mxu0 0
        %878 = vmatpush1.bf16.xpose.msra.mxu0 %v863
        %879 = vmatprep.subr.bf16.mxu0 0
        %880 = vmatpush1.bf16.xpose.msra.mxu0 %v860
        %881 = vmatprep.subr.bf16.mxu0 0
        %882 = vmatpush2.bf16.xpose.msra.mxu0 0
        %883 = vmatprep.subr.bf16.mxu0 0
        %884 = vmatpush2.bf16.xpose.msra.mxu0 0
        %885 = vmatprep.subr.bf16.mxu0 0
        %886 = vmatpush2.bf16.xpose.msra.mxu0 0
        %887 = vmatprep.subr.bf16.mxu0 0
        %888 = vmatpush2.bf16.xpose.msra.mxu0 0
        %889 = vmatprep.subr.bf16.mxu0 0
        %890 = vmatpush2.bf16.xpose.msra.mxu0 0
        %891 = vmatprep.subr.bf16.mxu0 0
        %892 = vmatpush2.bf16.xpose.msra.mxu0 0
        %893 = vmatprep.subr.bf16.mxu0 0
        %894 = vmatpush2.bf16.xpose.msra.mxu0 0
        %895 = vmatprep.subr.bf16.mxu0 0
        %896 = vmatpush2.bf16.xpose.msra.mxu0 0
        %897 = vmatprep.mubr.bf16.mxu0 0
        %898 = vmatmul.mubr.bf16.gmra.mxu0 %v857
        %v899 = vpop.f32.mrf.mxu0
        %v900 = vadd.f32 0.0, %v899
        %v901 = vpop.f32.mrf.mxu0
        %v902 = vpop.f32.mrf.mxu0
        %v903 = vadd.f32 0.0, %v902
        %v904 = vpop.f32.mrf.mxu0
        %905 = vdwg.mxu0
        %v906 = vmul.f32 %v900, 0.35355338
        %v907 = vmul.f32 %v903, 0.35355338
        %v908 = vadd.f32 %v906, %v847
        %v909 = vadd.f32 %v907, %v848
        %vm910 = vcmask 195584
        %v911 = vsel %vm910, %v908, -inf
        %912 = vmax.xlane.f32.xlu0 %v911
        %v913 = vpop.xlane.xlu0 %912
        %v914 = vsel %vm910, %v909, -inf
        %915 = vmax.xlane.f32.xlu0 %v914
        %v916 = vpop.xlane.xlu0 %915
        %v917 = vsub.f32 %v908, %v913
        %v918 = vsub.f32 %v909, %v916
        %v919 = vmul.f32 %v917, 1.442695
        %v920 = vpow.pop %v919
        %v921 = vmul.f32 %v918, 1.442695
        %v922 = vpow.pop %v921
        %v923 = vsel %vm910, %v920, 0.0
        %924 = vadd.xlane.f32.xlu0 %v923
        %v925 = vpop.xlane.xlu0 %924
        %v926 = vsel %vm910, %v922, 0.0
        %927 = vadd.xlane.f32.xlu0 %v926
        %v928 = vpop.xlane.xlu0 %927
        %v929 = vrcp.pop %v925
        %v930 = vrcp.pop %v928
        %v931 = vmul.f32 %v920, %v929
        %v932 = vmul.f32 %v922, %v930
        %v933 = vpack.c.bf16 %v932, %v931
        %934 = vrot.lane.b32.xlu0 %v839, 64
        %v935 = vpop.permute.xlu0 %934
        %936 = vrot.lane.b32.xlu0 %v840, 64
        %v937 = vpop.permute.xlu0 %936
        %v940 = vsel %vm910, %v933, 0
        %vm942 = vcmask 1043456
        %v944 = vsel %vm942, %v937, 0
        %946 = vmatprep.subr.bf16.mxu0 0
        %947 = vmatpush1.bf16.msra.mxu0 0
        %948 = vmatprep.subr.bf16.mxu0 0
        %949 = vmatpush1.bf16.msra.mxu0 0
        %950 = vmatprep.subr.bf16.mxu0 0
        %951 = vmatpush1.bf16.msra.mxu0 0
        %952 = vmatprep.subr.bf16.mxu0 0
        %953 = vmatpush1.bf16.msra.mxu0 0
        %954 = vmatprep.subr.bf16.mxu0 0
        %955 = vmatpush1.bf16.msra.mxu0 0
        %956 = vmatprep.subr.bf16.mxu0 0
        %957 = vmatpush1.bf16.msra.mxu0 0
        %958 = vmatprep.subr.bf16.mxu0 0
        %959 = vmatpush1.bf16.msra.mxu0 %v944
        %960 = vmatprep.subr.bf16.mxu0 0
        %961 = vmatpush1.bf16.msra.mxu0 %v935
        %962 = vmatprep.subr.bf16.mxu0 0
        %963 = vmatpush2.bf16.msra.mxu0 0
        %964 = vmatprep.subr.bf16.mxu0 0
        %965 = vmatpush2.bf16.msra.mxu0 0
        %966 = vmatprep.subr.bf16.mxu0 0
        %967 = vmatpush2.bf16.msra.mxu0 0
        %968 = vmatprep.subr.bf16.mxu0 0
        %969 = vmatpush2.bf16.msra.mxu0 0
        %970 = vmatprep.subr.bf16.mxu0 0
        %971 = vmatpush2.bf16.msra.mxu0 0
        %972 = vmatprep.subr.bf16.mxu0 0
        %973 = vmatpush2.bf16.msra.mxu0 0
        %974 = vmatprep.subr.bf16.mxu0 0
        %975 = vmatpush2.bf16.msra.mxu0 0
        %976 = vmatprep.subr.bf16.mxu0 0
        %977 = vmatpush2.bf16.msra.mxu0 0
        %978 = vmatprep.mubr.bf16.mxu0 0
        %979 = vmatmul.mubr.bf16.gmra.mxu0 %v940
        %v980 = vpop.f32.mrf.mxu0
        %v981 = vadd.f32 0.0, %v980
        %v982 = vpop.f32.mrf.mxu0
        %v983 = vpop.f32.mrf.mxu0
        %v984 = vadd.f32 0.0, %v983
        %v985 = vpop.f32.mrf.mxu0
        %986 = vdwg.mxu0
        %v987 = vpack.c.bf16 %v984, %v981
        %v988 = vld [vmem:[%s9] sm:$0xf]
        %989 = vrot.lane.b32.xlu0 %v839, 120
        %v990 = vpop.permute.xlu0 %989
        %991 = vrot.lane.b32.xlu0 %v839, 88
        %v992 = vpop.permute.xlu0 %991
        %993 = vrot.lane.b32.xlu0 %v840, 88
        %v994 = vpop.permute.xlu0 %993
        %v996 = vsel %vm855, %v990, 0
        %v999 = vsel %vm855, %v992, 0
        %v1002 = vsel %vm855, %v994, 0
        %1004 = vmatprep.subr.bf16.mxu0 0
        %1005 = vmatpush1.bf16.xpose.msra.mxu0 0
        %1006 = vmatprep.subr.bf16.mxu0 0
        %1007 = vmatpush1.bf16.xpose.msra.mxu0 0
        %1008 = vmatprep.subr.bf16.mxu0 0
        %1009 = vmatpush1.bf16.xpose.msra.mxu0 0
        %1010 = vmatprep.subr.bf16.mxu0 0
        %1011 = vmatpush1.bf16.xpose.msra.mxu0 0
        %1012 = vmatprep.subr.bf16.mxu0 0
        %1013 = vmatpush1.bf16.xpose.msra.mxu0 0
        %1014 = vmatprep.subr.bf16.mxu0 0
        %1015 = vmatpush1.bf16.xpose.msra.mxu0 0
        %1016 = vmatprep.subr.bf16.mxu0 0
        %1017 = vmatpush1.bf16.xpose.msra.mxu0 %v1002
        %1018 = vmatprep.subr.bf16.mxu0 0
        %1019 = vmatpush1.bf16.xpose.msra.mxu0 %v999
        %1020 = vmatprep.subr.bf16.mxu0 0
        %1021 = vmatpush2.bf16.xpose.msra.mxu0 0
        %1022 = vmatprep.subr.bf16.mxu0 0
        %1023 = vmatpush2.bf16.xpose.msra.mxu0 0
        %1024 = vmatprep.subr.bf16.mxu0 0
        %1025 = vmatpush2.bf16.xpose.msra.mxu0 0
        %1026 = vmatprep.subr.bf16.mxu0 0
        %1027 = vmatpush2.bf16.xpose.msra.mxu0 0
        %1028 = vmatprep.subr.bf16.mxu0 0
        %1029 = vmatpush2.bf16.xpose.msra.mxu0 0
        %1030 = vmatprep.subr.bf16.mxu0 0
        %1031 = vmatpush2.bf16.xpose.msra.mxu0 0
        %1032 = vmatprep.subr.bf16.mxu0 0
        %1033 = vmatpush2.bf16.xpose.msra.mxu0 0
        %1034 = vmatprep.subr.bf16.mxu0 0
        %1035 = vmatpush2.bf16.xpose.msra.mxu0 0
        %1036 = vmatprep.mubr.bf16.mxu0 0
        %1037 = vmatmul.mubr.bf16.gmra.mxu0 %v996
        %v1038 = vpop.f32.mrf.mxu0
        %v1039 = vadd.f32 0.0, %v1038
        %v1040 = vpop.f32.mrf.mxu0
        %v1041 = vpop.f32.mrf.mxu0
        %v1042 = vadd.f32 0.0, %v1041
        %v1043 = vpop.f32.mrf.mxu0
        %1044 = vdwg.mxu0
        %v1045 = vmul.f32 %v1039, 0.35355338
        %v1046 = vmul.f32 %v1042, 0.35355338
        %v1047 = vadd.f32 %v1045, %v847
        %v1048 = vadd.f32 %v1046, %v848
        %v1049 = vsel %vm910, %v1047, -inf
        %1050 = vmax.xlane.f32.xlu0 %v1049
        %v1051 = vpop.xlane.xlu0 %1050
        %v1052 = vsel %vm910, %v1048, -inf
        %1053 = vmax.xlane.f32.xlu0 %v1052
        %v1054 = vpop.xlane.xlu0 %1053
        %v1055 = vsub.f32 %v1047, %v1051
        %v1056 = vsub.f32 %v1048, %v1054
        %v1057 = vmul.f32 %v1055, 1.442695
        %v1058 = vpow.pop %v1057
        %v1059 = vmul.f32 %v1056, 1.442695
        %v1060 = vpow.pop %v1059
        %v1061 = vsel %vm910, %v1058, 0.0
        %1062 = vadd.xlane.f32.xlu0 %v1061
        %v1063 = vpop.xlane.xlu0 %1062
        %v1064 = vsel %vm910, %v1060, 0.0
        %1065 = vadd.xlane.f32.xlu0 %v1064
        %v1066 = vpop.xlane.xlu0 %1065
        %v1067 = vrcp.pop %v1063
        %v1068 = vrcp.pop %v1066
        %v1069 = vmul.f32 %v1058, %v1067
        %v1070 = vmul.f32 %v1060, %v1068
        %v1071 = vpack.c.bf16 %v1070, %v1069
        %1072 = vrot.lane.b32.xlu0 %v839, 56
        %v1073 = vpop.permute.xlu0 %1072
        %1074 = vrot.lane.b32.xlu0 %v840, 56
        %v1075 = vpop.permute.xlu0 %1074
        %v1078 = vsel %vm910, %v1071, 0
        %v1081 = vsel %vm942, %v1075, 0
        %1083 = vmatprep.subr.bf16.mxu0 0
        %1084 = vmatpush1.bf16.msra.mxu0 0
        %1085 = vmatprep.subr.bf16.mxu0 0
        %1086 = vmatpush1.bf16.msra.mxu0 0
        %1087 = vmatprep.subr.bf16.mxu0 0
        %1088 = vmatpush1.bf16.msra.mxu0 0
        %1089 = vmatprep.subr.bf16.mxu0 0
        %1090 = vmatpush1.bf16.msra.mxu0 0
        %1091 = vmatprep.subr.bf16.mxu0 0
        %1092 = vmatpush1.bf16.msra.mxu0 0
        %1093 = vmatprep.subr.bf16.mxu0 0
        %1094 = vmatpush1.bf16.msra.mxu0 0
        %1095 = vmatprep.subr.bf16.mxu0 0
        %1096 = vmatpush1.bf16.msra.mxu0 %v1081
        %1097 = vmatprep.subr.bf16.mxu0 0
        %1098 = vmatpush1.bf16.msra.mxu0 %v1073
        %1099 = vmatprep.subr.bf16.mxu0 0
        %1100 = vmatpush2.bf16.msra.mxu0 0
        %1101 = vmatprep.subr.bf16.mxu0 0
        %1102 = vmatpush2.bf16.msra.mxu0 0
        %1103 = vmatprep.subr.bf16.mxu0 0
        %1104 = vmatpush2.bf16.msra.mxu0 0
        %1105 = vmatprep.subr.bf16.mxu0 0
        %1106 = vmatpush2.bf16.msra.mxu0 0
        %1107 = vmatprep.subr.bf16.mxu0 0
        %1108 = vmatpush2.bf16.msra.mxu0 0
        %1109 = vmatprep.subr.bf16.mxu0 0
        %1110 = vmatpush2.bf16.msra.mxu0 0
        %1111 = vmatprep.subr.bf16.mxu0 0
        %1112 = vmatpush2.bf16.msra.mxu0 0
        %1113 = vmatprep.subr.bf16.mxu0 0
        %1114 = vmatpush2.bf16.msra.mxu0 0
        %1115 = vmatprep.mubr.bf16.mxu0 0
        %1116 = vmatmul.mubr.bf16.gmra.mxu0 %v1078
        %v1117 = vpop.f32.mrf.mxu0
        %v1118 = vadd.f32 0.0, %v1117
        %v1119 = vpop.f32.mrf.mxu0
        %v1120 = vpop.f32.mrf.mxu0
        %v1121 = vadd.f32 0.0, %v1120
        %v1122 = vpop.f32.mrf.mxu0
        %1123 = vdwg.mxu0
        %v1124 = vpack.c.bf16 %v1121, %v1118
        %v1125 = vld [vmem:[%s9 + $0x4] sm:$0xf]
        %v1127 = vsel %vm855, %v1124, 0
        %v1130 = vsel %vm942, %v1125, 0
        %1132 = vmatprep.subr.bf16.mxu0 0
        %1133 = vmatpush1.bf16.msra.mxu0 0
        %1134 = vmatprep.subr.bf16.mxu0 0
        %1135 = vmatpush1.bf16.msra.mxu0 0
        %1136 = vmatprep.subr.bf16.mxu0 0
        %1137 = vmatpush1.bf16.msra.mxu0 0
        %1138 = vmatprep.subr.bf16.mxu0 0
        %1139 = vmatpush1.bf16.msra.mxu0 0
        %1140 = vmatprep.subr.bf16.mxu0 0
        %1141 = vmatpush1.bf16.msra.mxu0 0
        %1142 = vmatprep.subr.bf16.mxu0 0
        %1143 = vmatpush1.bf16.msra.mxu0 0
        %1144 = vmatprep.subr.bf16.mxu0 0
        %1145 = vmatpush1.bf16.msra.mxu0 0
        %1146 = vmatprep.subr.bf16.mxu0 0
        %1147 = vmatpush1.bf16.msra.mxu0 %v1130
        %1148 = vmatprep.subr.bf16.mxu0 0
        %1149 = vmatpush2.bf16.msra.mxu0 0
        %1150 = vmatprep.subr.bf16.mxu0 0
        %1151 = vmatpush2.bf16.msra.mxu0 0
        %1152 = vmatprep.subr.bf16.mxu0 0
        %1153 = vmatpush2.bf16.msra.mxu0 0
        %1154 = vmatprep.subr.bf16.mxu0 0
        %1155 = vmatpush2.bf16.msra.mxu0 0
        %1156 = vmatprep.subr.bf16.mxu0 0
        %1157 = vmatpush2.bf16.msra.mxu0 0
        %1158 = vmatprep.subr.bf16.mxu0 0
        %1159 = vmatpush2.bf16.msra.mxu0 0
        %1160 = vmatprep.subr.bf16.mxu0 0
        %1161 = vmatpush2.bf16.msra.mxu0 0
        %1162 = vmatprep.subr.bf16.mxu0 0
        %1163 = vmatpush2.bf16.msra.mxu0 0
        %1164 = vmatprep.mubr.bf16.mxu0 0
        %1165 = vmatmul.mubr.bf16.gmra.mxu0 %v1127
        %v1166 = vpop.f32.mrf.mxu0
        %v1167 = vadd.f32 0.0, %v1166
        %v1168 = vpop.f32.mrf.mxu0
        %v1169 = vpop.f32.mrf.mxu0
        %v1170 = vadd.f32 0.0, %v1169
        %v1171 = vpop.f32.mrf.mxu0
        %1172 = vdwg.mxu0
        %v1174 = vsel %vm855, %v987, 0
        %v1177 = vsel %vm942, %v988, 0
        %1179 = vmatprep.subr.bf16.mxu0 0
        %1180 = vmatpush1.bf16.msra.mxu0 0
        %1181 = vmatprep.subr.bf16.mxu0 0
        %1182 = vmatpush1.bf16.msra.mxu0 0
        %1183 = vmatprep.subr.bf16.mxu0 0
        %1184 = vmatpush1.bf16.msra.mxu0 0
        %1185 = vmatprep.subr.bf16.mxu0 0
        %1186 = vmatpush1.bf16.msra.mxu0 0
        %1187 = vmatprep.subr.bf16.mxu0 0
        %1188 = vmatpush1.bf16.msra.mxu0 0
        %1189 = vmatprep.subr.bf16.mxu0 0
        %1190 = vmatpush1.bf16.msra.mxu0 0
        %1191 = vmatprep.subr.bf16.mxu0 0
        %1192 = vmatpush1.bf16.msra.mxu0 0
        %1193 = vmatprep.subr.bf16.mxu0 0
        %1194 = vmatpush1.bf16.msra.mxu0 %v1177
        %1195 = vmatprep.subr.bf16.mxu0 0
        %1196 = vmatpush2.bf16.msra.mxu0 0
        %1197 = vmatprep.subr.bf16.mxu0 0
        %1198 = vmatpush2.bf16.msra.mxu0 0
        %1199 = vmatprep.subr.bf16.mxu0 0
        %1200 = vmatpush2.bf16.msra.mxu0 0
        %1201 = vmatprep.subr.bf16.mxu0 0
        %1202 = vmatpush2.bf16.msra.mxu0 0
        %1203 = vmatprep.subr.bf16.mxu0 0
        %1204 = vmatpush2.bf16.msra.mxu0 0
        %1205 = vmatprep.subr.bf16.mxu0 0
        %1206 = vmatpush2.bf16.msra.mxu0 0
        %1207 = vmatprep.subr.bf16.mxu0 0
        %1208 = vmatpush2.bf16.msra.mxu0 0
        %1209 = vmatprep.subr.bf16.mxu0 0
        %1210 = vmatpush2.bf16.msra.mxu0 0
        %1211 = vmatprep.mubr.bf16.mxu0 0
        %1212 = vmatmul.mubr.bf16.gmra.mxu0 %v1174
        %v1213 = vpop.f32.mrf.mxu0
        %v1214 = vadd.f32 %v1167, %v1213
        %v1215 = vpop.f32.mrf.mxu0
        %v1216 = vpop.f32.mrf.mxu0
        %v1217 = vadd.f32 %v1170, %v1216
        %v1218 = vpop.f32.mrf.mxu0
        %1219 = vdwg.mxu0
        %1220 = vrot.lane.b32.xlu0 %v839, 112
        %v1221 = vpop.permute.xlu0 %1220
        %1222 = vrot.lane.b32.xlu0 %v839, 80
        %v1223 = vpop.permute.xlu0 %1222
        %1224 = vrot.lane.b32.xlu0 %v840, 80
        %v1225 = vpop.permute.xlu0 %1224
        %v1227 = vsel %vm855, %v1221, 0
        %v1230 = vsel %vm855, %v1223, 0
        %v1233 = vsel %vm855, %v1225, 0
        %1235 = vmatprep.subr.bf16.mxu0 0
        %1236 = vmatpush1.bf16.xpose.msra.mxu0 0
        %1237 = vmatprep.subr.bf16.mxu0 0
        %1238 = vmatpush1.bf16.xpose.msra.mxu0 0
        %1239 = vmatprep.subr.bf16.mxu0 0
        %1240 = vmatpush1.bf16.xpose.msra.mxu0 0
        %1241 = vmatprep.subr.bf16.mxu0 0
        %1242 = vmatpush1.bf16.xpose.msra.mxu0 0
        %1243 = vmatprep.subr.bf16.mxu0 0
        %1244 = vmatpush1.bf16.xpose.msra.mxu0 0
        %1245 = vmatprep.subr.bf16.mxu0 0
        %1246 = vmatpush1.bf16.xpose.msra.mxu0 0
        %1247 = vmatprep.subr.bf16.mxu0 0
        %1248 = vmatpush1.bf16.xpose.msra.mxu0 %v1233
        %1249 = vmatprep.subr.bf16.mxu0 0
        %1250 = vmatpush1.bf16.xpose.msra.mxu0 %v1230
        %1251 = vmatprep.subr.bf16.mxu0 0
        %1252 = vmatpush2.bf16.xpose.msra.mxu0 0
        %1253 = vmatprep.subr.bf16.mxu0 0
        %1254 = vmatpush2.bf16.xpose.msra.mxu0 0
        %1255 = vmatprep.subr.bf16.mxu0 0
        %1256 = vmatpush2.bf16.xpose.msra.mxu0 0
        %1257 = vmatprep.subr.bf16.mxu0 0
        %1258 = vmatpush2.bf16.xpose.msra.mxu0 0
        %1259 = vmatprep.subr.bf16.mxu0 0
        %1260 = vmatpush2.bf16.xpose.msra.mxu0 0
        %1261 = vmatprep.subr.bf16.mxu0 0
        %1262 = vmatpush2.bf16.xpose.msra.mxu0 0
        %1263 = vmatprep.subr.bf16.mxu0 0
        %1264 = vmatpush2.bf16.xpose.msra.mxu0 0
        %1265 = vmatprep.subr.bf16.mxu0 0
        %1266 = vmatpush2.bf16.xpose.msra.mxu0 0
        %1267 = vmatprep.mubr.bf16.mxu0 0
        %1268 = vmatmul.mubr.bf16.gmra.mxu0 %v1227
        %v1269 = vpop.f32.mrf.mxu0
        %v1270 = vadd.f32 0.0, %v1269
        %v1271 = vpop.f32.mrf.mxu0
        %v1272 = vpop.f32.mrf.mxu0
        %v1273 = vadd.f32 0.0, %v1272
        %v1274 = vpop.f32.mrf.mxu0
        %1275 = vdwg.mxu0
        %v1276 = vmul.f32 %v1270, 0.35355338
        %v1277 = vmul.f32 %v1273, 0.35355338
        %v1278 = vadd.f32 %v1276, %v847
        %v1279 = vadd.f32 %v1277, %v848
        %v1280 = vsel %vm910, %v1278, -inf
        %1281 = vmax.xlane.f32.xlu0 %v1280
        %v1282 = vpop.xlane.xlu0 %1281
        %v1283 = vsel %vm910, %v1279, -inf
        %1284 = vmax.xlane.f32.xlu0 %v1283
        %v1285 = vpop.xlane.xlu0 %1284
        %v1286 = vsub.f32 %v1278, %v1282
        %v1287 = vsub.f32 %v1279, %v1285
        %v1288 = vmul.f32 %v1286, 1.442695
        %v1289 = vpow.pop %v1288
        %v1290 = vmul.f32 %v1287, 1.442695
        %v1291 = vpow.pop %v1290
        %v1292 = vsel %vm910, %v1289, 0.0
        %1293 = vadd.xlane.f32.xlu0 %v1292
        %v1294 = vpop.xlane.xlu0 %1293
        %v1295 = vsel %vm910, %v1291, 0.0
        %1296 = vadd.xlane.f32.xlu0 %v1295
        %v1297 = vpop.xlane.xlu0 %1296
        %v1298 = vrcp.pop %v1294
        %v1299 = vrcp.pop %v1297
        %v1300 = vmul.f32 %v1289, %v1298
        %v1301 = vmul.f32 %v1291, %v1299
        %v1302 = vpack.c.bf16 %v1301, %v1300
        %1303 = vrot.lane.b32.xlu0 %v839, 48
        %v1304 = vpop.permute.xlu0 %1303
        %1305 = vrot.lane.b32.xlu0 %v840, 48
        %v1306 = vpop.permute.xlu0 %1305
        %v1309 = vsel %vm910, %v1302, 0
        %v1312 = vsel %vm942, %v1306, 0
        %1314 = vmatprep.subr.bf16.mxu0 0
        %1315 = vmatpush1.bf16.msra.mxu0 0
        %1316 = vmatprep.subr.bf16.mxu0 0
        %1317 = vmatpush1.bf16.msra.mxu0 0
        %1318 = vmatprep.subr.bf16.mxu0 0
        %1319 = vmatpush1.bf16.msra.mxu0 0
        %1320 = vmatprep.subr.bf16.mxu0 0
        %1321 = vmatpush1.bf16.msra.mxu0 0
        %1322 = vmatprep.subr.bf16.mxu0 0
        %1323 = vmatpush1.bf16.msra.mxu0 0
        %1324 = vmatprep.subr.bf16.mxu0 0
        %1325 = vmatpush1.bf16.msra.mxu0 0
        %1326 = vmatprep.subr.bf16.mxu0 0
        %1327 = vmatpush1.bf16.msra.mxu0 %v1312
        %1328 = vmatprep.subr.bf16.mxu0 0
        %1329 = vmatpush1.bf16.msra.mxu0 %v1304
        %1330 = vmatprep.subr.bf16.mxu0 0
        %1331 = vmatpush2.bf16.msra.mxu0 0
        %1332 = vmatprep.subr.bf16.mxu0 0
        %1333 = vmatpush2.bf16.msra.mxu0 0
        %1334 = vmatprep.subr.bf16.mxu0 0
        %1335 = vmatpush2.bf16.msra.mxu0 0
        %1336 = vmatprep.subr.bf16.mxu0 0
        %1337 = vmatpush2.bf16.msra.mxu0 0
        %1338 = vmatprep.subr.bf16.mxu0 0
        %1339 = vmatpush2.bf16.msra.mxu0 0
        %1340 = vmatprep.subr.bf16.mxu0 0
        %1341 = vmatpush2.bf16.msra.mxu0 0
        %1342 = vmatprep.subr.bf16.mxu0 0
        %1343 = vmatpush2.bf16.msra.mxu0 0
        %1344 = vmatprep.subr.bf16.mxu0 0
        %1345 = vmatpush2.bf16.msra.mxu0 0
        %1346 = vmatprep.mubr.bf16.mxu0 0
        %1347 = vmatmul.mubr.bf16.gmra.mxu0 %v1309
        %v1348 = vpop.f32.mrf.mxu0
        %v1349 = vadd.f32 0.0, %v1348
        %v1350 = vpop.f32.mrf.mxu0
        %v1351 = vpop.f32.mrf.mxu0
        %v1352 = vadd.f32 0.0, %v1351
        %v1353 = vpop.f32.mrf.mxu0
        %1354 = vdwg.mxu0
        %v1355 = vpack.c.bf16 %v1352, %v1349
        %v1356 = vld [vmem:[%s9 + $0x8] sm:$0xf]
        %v1358 = vsel %vm855, %v1355, 0
        %v1361 = vsel %vm942, %v1356, 0
        %1363 = vmatprep.subr.bf16.mxu0 0
        %1364 = vmatpush1.bf16.msra.mxu0 0
        %1365 = vmatprep.subr.bf16.mxu0 0
        %1366 = vmatpush1.bf16.msra.mxu0 0
        %1367 = vmatprep.subr.bf16.mxu0 0
        %1368 = vmatpush1.bf16.msra.mxu0 0
        %1369 = vmatprep.subr.bf16.mxu0 0
        %1370 = vmatpush1.bf16.msra.mxu0 0
        %1371 = vmatprep.subr.bf16.mxu0 0
        %1372 = vmatpush1.bf16.msra.mxu0 0
        %1373 = vmatprep.subr.bf16.mxu0 0
        %1374 = vmatpush1.bf16.msra.mxu0 0
        %1375 = vmatprep.subr.bf16.mxu0 0
        %1376 = vmatpush1.bf16.msra.mxu0 0
        %1377 = vmatprep.subr.bf16.mxu0 0
        %1378 = vmatpush1.bf16.msra.mxu0 %v1361
        %1379 = vmatprep.subr.bf16.mxu0 0
        %1380 = vmatpush2.bf16.msra.mxu0 0
        %1381 = vmatprep.subr.bf16.mxu0 0
        %1382 = vmatpush2.bf16.msra.mxu0 0
        %1383 = vmatprep.subr.bf16.mxu0 0
        %1384 = vmatpush2.bf16.msra.mxu0 0
        %1385 = vmatprep.subr.bf16.mxu0 0
        %1386 = vmatpush2.bf16.msra.mxu0 0
        %1387 = vmatprep.subr.bf16.mxu0 0
        %1388 = vmatpush2.bf16.msra.mxu0 0
        %1389 = vmatprep.subr.bf16.mxu0 0
        %1390 = vmatpush2.bf16.msra.mxu0 0
        %1391 = vmatprep.subr.bf16.mxu0 0
        %1392 = vmatpush2.bf16.msra.mxu0 0
        %1393 = vmatprep.subr.bf16.mxu0 0
        %1394 = vmatpush2.bf16.msra.mxu0 0
        %1395 = vmatprep.mubr.bf16.mxu0 0
        %1396 = vmatmul.mubr.bf16.gmra.mxu0 %v1358
        %v1397 = vpop.f32.mrf.mxu0
        %v1398 = vadd.f32 0.0, %v1397
        %v1399 = vpop.f32.mrf.mxu0
        %v1400 = vpop.f32.mrf.mxu0
        %v1401 = vadd.f32 0.0, %v1400
        %v1402 = vpop.f32.mrf.mxu0
        %1403 = vdwg.mxu0
        %v1404 = vadd.f32 %v1214, %v1398
        %v1405 = vadd.f32 %v1217, %v1401
        %1406 = vrot.lane.b32.xlu0 %v839, 104
        %v1407 = vpop.permute.xlu0 %1406
        %1408 = vrot.lane.b32.xlu0 %v839, 72
        %v1409 = vpop.permute.xlu0 %1408
        %1410 = vrot.lane.b32.xlu0 %v840, 72
        %v1411 = vpop.permute.xlu0 %1410
        %v1413 = vsel %vm855, %v1407, 0
        %v1416 = vsel %vm855, %v1409, 0
        %v1419 = vsel %vm855, %v1411, 0
        %1421 = vmatprep.subr.bf16.mxu0 0
        %1422 = vmatpush1.bf16.xpose.msra.mxu0 0
        %1423 = vmatprep.subr.bf16.mxu0 0
        %1424 = vmatpush1.bf16.xpose.msra.mxu0 0
        %1425 = vmatprep.subr.bf16.mxu0 0
        %1426 = vmatpush1.bf16.xpose.msra.mxu0 0
        %1427 = vmatprep.subr.bf16.mxu0 0
        %1428 = vmatpush1.bf16.xpose.msra.mxu0 0
        %1429 = vmatprep.subr.bf16.mxu0 0
        %1430 = vmatpush1.bf16.xpose.msra.mxu0 0
        %1431 = vmatprep.subr.bf16.mxu0 0
        %1432 = vmatpush1.bf16.xpose.msra.mxu0 0
        %1433 = vmatprep.subr.bf16.mxu0 0
        %1434 = vmatpush1.bf16.xpose.msra.mxu0 %v1419
        %1435 = vmatprep.subr.bf16.mxu0 0
        %1436 = vmatpush1.bf16.xpose.msra.mxu0 %v1416
        %1437 = vmatprep.subr.bf16.mxu0 0
        %1438 = vmatpush2.bf16.xpose.msra.mxu0 0
        %1439 = vmatprep.subr.bf16.mxu0 0
        %1440 = vmatpush2.bf16.xpose.msra.mxu0 0
        %1441 = vmatprep.subr.bf16.mxu0 0
        %1442 = vmatpush2.bf16.xpose.msra.mxu0 0
        %1443 = vmatprep.subr.bf16.mxu0 0
        %1444 = vmatpush2.bf16.xpose.msra.mxu0 0
        %1445 = vmatprep.subr.bf16.mxu0 0
        %1446 = vmatpush2.bf16.xpose.msra.mxu0 0
        %1447 = vmatprep.subr.bf16.mxu0 0
        %1448 = vmatpush2.bf16.xpose.msra.mxu0 0
        %1449 = vmatprep.subr.bf16.mxu0 0
        %1450 = vmatpush2.bf16.xpose.msra.mxu0 0
        %1451 = vmatprep.subr.bf16.mxu0 0
        %1452 = vmatpush2.bf16.xpose.msra.mxu0 0
        %1453 = vmatprep.mubr.bf16.mxu0 0
        %1454 = vmatmul.mubr.bf16.gmra.mxu0 %v1413
        %v1455 = vpop.f32.mrf.mxu0
        %v1456 = vadd.f32 0.0, %v1455
        %v1457 = vpop.f32.mrf.mxu0
        %v1458 = vpop.f32.mrf.mxu0
        %v1459 = vadd.f32 0.0, %v1458
        %v1460 = vpop.f32.mrf.mxu0
        %1461 = vdwg.mxu0
        %v1462 = vmul.f32 %v1456, 0.35355338
        %v1463 = vmul.f32 %v1459, 0.35355338
        %v1464 = vadd.f32 %v1462, %v847
        %v1465 = vadd.f32 %v1463, %v848
        %v1466 = vsel %vm910, %v1464, -inf
        %1467 = vmax.xlane.f32.xlu0 %v1466
        %v1468 = vpop.xlane.xlu0 %1467
        %v1469 = vsel %vm910, %v1465, -inf
        %1470 = vmax.xlane.f32.xlu0 %v1469
        %v1471 = vpop.xlane.xlu0 %1470
        %v1472 = vsub.f32 %v1464, %v1468
        %v1473 = vsub.f32 %v1465, %v1471
        %v1474 = vmul.f32 %v1472, 1.442695
        %v1475 = vpow.pop %v1474
        %v1476 = vmul.f32 %v1473, 1.442695
        %v1477 = vpow.pop %v1476
        %v1478 = vsel %vm910, %v1475, 0.0
        %1479 = vadd.xlane.f32.xlu0 %v1478
        %v1480 = vpop.xlane.xlu0 %1479
        %v1481 = vsel %vm910, %v1477, 0.0
        %1482 = vadd.xlane.f32.xlu0 %v1481
        %v1483 = vpop.xlane.xlu0 %1482
        %v1484 = vrcp.pop %v1480
        %v1485 = vrcp.pop %v1483
        %v1486 = vmul.f32 %v1475, %v1484
        %v1487 = vmul.f32 %v1477, %v1485
        %v1488 = vpack.c.bf16 %v1487, %v1486
        %1489 = vrot.lane.b32.xlu0 %v839, 40
        %v1490 = vpop.permute.xlu0 %1489
        %1491 = vrot.lane.b32.xlu0 %v840, 40
        %v1492 = vpop.permute.xlu0 %1491
        %v1495 = vsel %vm910, %v1488, 0
        %v1498 = vsel %vm942, %v1492, 0
        %1500 = vmatprep.subr.bf16.mxu0 0
        %1501 = vmatpush1.bf16.msra.mxu0 0
        %1502 = vmatprep.subr.bf16.mxu0 0
        %1503 = vmatpush1.bf16.msra.mxu0 0
        %1504 = vmatprep.subr.bf16.mxu0 0
        %1505 = vmatpush1.bf16.msra.mxu0 0
        %1506 = vmatprep.subr.bf16.mxu0 0
        %1507 = vmatpush1.bf16.msra.mxu0 0
        %1508 = vmatprep.subr.bf16.mxu0 0
        %1509 = vmatpush1.bf16.msra.mxu0 0
        %1510 = vmatprep.subr.bf16.mxu0 0
        %1511 = vmatpush1.bf16.msra.mxu0 0
        %1512 = vmatprep.subr.bf16.mxu0 0
        %1513 = vmatpush1.bf16.msra.mxu0 %v1498
        %1514 = vmatprep.subr.bf16.mxu0 0
        %1515 = vmatpush1.bf16.msra.mxu0 %v1490
        %1516 = vmatprep.subr.bf16.mxu0 0
        %1517 = vmatpush2.bf16.msra.mxu0 0
        %1518 = vmatprep.subr.bf16.mxu0 0
        %1519 = vmatpush2.bf16.msra.mxu0 0
        %1520 = vmatprep.subr.bf16.mxu0 0
        %1521 = vmatpush2.bf16.msra.mxu0 0
        %1522 = vmatprep.subr.bf16.mxu0 0
        %1523 = vmatpush2.bf16.msra.mxu0 0
        %1524 = vmatprep.subr.bf16.mxu0 0
        %1525 = vmatpush2.bf16.msra.mxu0 0
        %1526 = vmatprep.subr.bf16.mxu0 0
        %1527 = vmatpush2.bf16.msra.mxu0 0
        %1528 = vmatprep.subr.bf16.mxu0 0
        %1529 = vmatpush2.bf16.msra.mxu0 0
        %1530 = vmatprep.subr.bf16.mxu0 0
        %1531 = vmatpush2.bf16.msra.mxu0 0
        %1532 = vmatprep.mubr.bf16.mxu0 0
        %1533 = vmatmul.mubr.bf16.gmra.mxu0 %v1495
        %v1534 = vpop.f32.mrf.mxu0
        %v1535 = vadd.f32 0.0, %v1534
        %v1536 = vpop.f32.mrf.mxu0
        %v1537 = vpop.f32.mrf.mxu0
        %v1538 = vadd.f32 0.0, %v1537
        %v1539 = vpop.f32.mrf.mxu0
        %1540 = vdwg.mxu0
        %v1541 = vpack.c.bf16 %v1538, %v1535
        %v1542 = vld [vmem:[%s9 + $0xc] sm:$0xf]
        %v1544 = vsel %vm855, %v1541, 0
        %v1547 = vsel %vm942, %v1542, 0
        %1549 = vmatprep.subr.bf16.mxu0 0
        %1550 = vmatpush1.bf16.msra.mxu0 0
        %1551 = vmatprep.subr.bf16.mxu0 0
        %1552 = vmatpush1.bf16.msra.mxu0 0
        %1553 = vmatprep.subr.bf16.mxu0 0
        %1554 = vmatpush1.bf16.msra.mxu0 0
        %1555 = vmatprep.subr.bf16.mxu0 0
        %1556 = vmatpush1.bf16.msra.mxu0 0
        %1557 = vmatprep.subr.bf16.mxu0 0
        %1558 = vmatpush1.bf16.msra.mxu0 0
        %1559 = vmatprep.subr.bf16.mxu0 0
        %1560 = vmatpush1.bf16.msra.mxu0 0
        %1561 = vmatprep.subr.bf16.mxu0 0
        %1562 = vmatpush1.bf16.msra.mxu0 0
        %1563 = vmatprep.subr.bf16.mxu0 0
        %1564 = vmatpush1.bf16.msra.mxu0 %v1547
        %1565 = vmatprep.subr.bf16.mxu0 0
        %1566 = vmatpush2.bf16.msra.mxu0 0
        %1567 = vmatprep.subr.bf16.mxu0 0
        %1568 = vmatpush2.bf16.msra.mxu0 0
        %1569 = vmatprep.subr.bf16.mxu0 0
        %1570 = vmatpush2.bf16.msra.mxu0 0
        %1571 = vmatprep.subr.bf16.mxu0 0
        %1572 = vmatpush2.bf16.msra.mxu0 0
        %1573 = vmatprep.subr.bf16.mxu0 0
        %1574 = vmatpush2.bf16.msra.mxu0 0
        %1575 = vmatprep.subr.bf16.mxu0 0
        %1576 = vmatpush2.bf16.msra.mxu0 0
        %1577 = vmatprep.subr.bf16.mxu0 0
        %1578 = vmatpush2.bf16.msra.mxu0 0
        %1579 = vmatprep.subr.bf16.mxu0 0
        %1580 = vmatpush2.bf16.msra.mxu0 0
        %1581 = vmatprep.mubr.bf16.mxu0 0
        %1582 = vmatmul.mubr.bf16.gmra.mxu0 %v1544
        %v1583 = vpop.f32.mrf.mxu0
        %v1584 = vadd.f32 0.0, %v1583
        %v1585 = vpop.f32.mrf.mxu0
        %v1586 = vpop.f32.mrf.mxu0
        %v1587 = vadd.f32 0.0, %v1586
        %v1588 = vpop.f32.mrf.mxu0
        %1589 = vdwg.mxu0
        %v1590 = vadd.f32 %v1404, %v1584
        %v1591 = vadd.f32 %v1405, %v1587
        %v1592 = vld [vmem:[%s10] sm:$0x1]
        %v1594 = vlaneseq
        %v1595 = vshrl.u32 %v1594, 7
        %v1596 = vsub.s32 0, %v1595
        %v1597 = vrot.slane %v1592, %v1596
        %v1599 = vadd.f32 %v1590, %v1597
        %v1600 = vadd.f32 %v1591, %v1597
        %v1601 = vadd.f32 %v658, %v1599
        %v1602 = vadd.f32 %v659, %v1600
        %v1603 = vmul.f32 %v1601, %v1601
        %v1604 = vmul.f32 %v1602, %v1602
        %v1605 = vsel %vm680, %v1603, 0.0
        %1606 = vadd.xlane.f32.xlu0 %v1605
        %v1607 = vpop.xlane.xlu0 %1606
        %v1608 = vsel %vm680, %v1604, 0.0
        %1609 = vadd.xlane.f32.xlu0 %v1608
        %v1610 = vpop.xlane.xlu0 %1609
        %v1611 = vmul.f32 %v1607, %v732
        %v1612 = vmul.f32 %v1610, %v732
        %v1613 = vadd.f32 %v1611, 1e-06
        %v1614 = vadd.f32 %v1612, 1e-06
        %v1615 = vrsqrt.pop %v1613
        %v1616 = vrsqrt.pop %v1614
        %v1617 = vmul.f32 %v1601, %v1615
        %v1618 = vmul.f32 %v1602, %v1616
        %1619 = vrot.lane.b32.xlu0 %v744, 64
        %v1620 = vpop.permute.xlu0 %1619
        %v1622 = vmul.f32 %v1617, %v1620
        %v1623 = vmul.f32 %v1618, %v1620
        %v1624 = vmul.f32 %v1622, %v651
        %v1625 = vmul.f32 %v1623, %v656
        %v1626 = vpack.c.bf16 %v1625, %v1624
        %v1627 = vld [vmem:[#allocation10] sm:$0xf]
        %v1628 = vld [vmem:[#allocation10 + $0x4] sm:$0xf]
        %v1629 = vld [vmem:[#allocation10 + $0x8] sm:$0xf]
        %v1630 = vld [vmem:[#allocation10 + $0xc] sm:$0xf]
        %v1631 = vld [vmem:[%s12] sm:$0x1]
        %v1633 = vlaneseq
        %v1634 = vshrl.u32 %v1633, 7
        %v1635 = vsub.s32 0, %v1634
        %v1636 = vrot.slane %v1631, %v1635
        %v1642 = vunpack.c.l.b16 %v1627
        %v1643 = vunpack.c.l.b16 %v1628
        %v1644 = vunpack.c.l.b16 %v1629
        %v1645 = vunpack.c.l.b16 %v1630
        %v1646 = vpack.c.b16 %v1643, %v1642
        %v1647 = vpack.c.b16 %v1645, %v1644
        %v1651 = vsel %vm680, %v1626, 0
        %1653 = vmatprep.subr.bf16.mxu0 0
        %1654 = vmatpush1.bf16.msra.mxu0 0
        %1655 = vmatprep.subr.bf16.mxu0 0
        %1656 = vmatpush1.bf16.msra.mxu0 0
        %1657 = vmatprep.subr.bf16.mxu0 0
        %1658 = vmatpush1.bf16.msra.mxu0 0
        %1659 = vmatprep.subr.bf16.mxu0 0
        %1660 = vmatpush1.bf16.msra.mxu0 0
        %1661 = vmatprep.subr.bf16.mxu0 0
        %1662 = vmatpush1.bf16.msra.mxu0 0
        %1663 = vmatprep.subr.bf16.mxu0 0
        %1664 = vmatpush1.bf16.msra.mxu0 0
        %1665 = vmatprep.subr.bf16.mxu0 0
        %1666 = vmatpush1.bf16.msra.mxu0 %v1647
        %1667 = vmatprep.subr.bf16.mxu0 0
        %1668 = vmatpush1.bf16.msra.mxu0 %v1646
        %1669 = vmatprep.subr.bf16.mxu0 0
        %1670 = vmatpush2.bf16.msra.mxu0 0
        %1671 = vmatprep.subr.bf16.mxu0 0
        %1672 = vmatpush2.bf16.msra.mxu0 0
        %1673 = vmatprep.subr.bf16.mxu0 0
        %1674 = vmatpush2.bf16.msra.mxu0 0
        %1675 = vmatprep.subr.bf16.mxu0 0
        %1676 = vmatpush2.bf16.msra.mxu0 0
        %1677 = vmatprep.subr.bf16.mxu0 0
        %1678 = vmatpush2.bf16.msra.mxu0 0
        %1679 = vmatprep.subr.bf16.mxu0 0
        %1680 = vmatpush2.bf16.msra.mxu0 0
        %1681 = vmatprep.subr.bf16.mxu0 0
        %1682 = vmatpush2.bf16.msra.mxu0 0
        %1683 = vmatprep.subr.bf16.mxu0 0
        %1684 = vmatpush2.bf16.msra.mxu0 0
        %1685 = vmatprep.mubr.bf16.mxu0 0
        %1686 = vmatmul.mubr.bf16.gmra.mxu0 %v1651
        %v1687 = vpop.f32.mrf.mxu0
        %v1688 = vadd.f32 %v1636, %v1687
        %v1689 = vpop.f32.mrf.mxu0
        %v1690 = vpop.f32.mrf.mxu0
        %v1691 = vadd.f32 %v1636, %v1690
        %v1692 = vpop.f32.mrf.mxu0
        %1693 = vdwg.mxu0
        %v1694 = vxor.u32 %v1688, 2147483648
        %v1695 = vxor.u32 %v1691, 2147483648
        %v1696 = vmul.f32 %v1694, 1.442695
        %v1697 = vpow.pop %v1696
        %v1698 = vmul.f32 %v1695, 1.442695
        %v1699 = vpow.pop %v1698
        %v1700 = vadd.f32 %v1697, 1.0
        %v1701 = vadd.f32 %v1699, 1.0
        %v1702 = vrcp.pop %v1700
        %v1703 = vmul.f32 1.0, %v1702
        %v1704 = vrcp.pop %v1701
        %v1705 = vmul.f32 1.0, %v1704
        %1708 = vrot.lane.b32.xlu0 %v1703, 64
        %v1709 = vpop.permute.xlu0 %1708
        %1710 = vrot.lane.b32.xlu0 %v1705, 64
        %v1711 = vpop.permute.xlu0 %1710
        %v1714 = vmul.f32 %v1688, %v1709
        %v1715 = vmul.f32 %v1691, %v1711
        %v1716 = vmul.f32 %v1714, %v651
        %v1717 = vmul.f32 %v1715, %v656
        %v1718 = vpack.c.bf16 %v1717, %v1716
        %v1719 = vld [vmem:[%s13] sm:$0xf]
        %v1720 = vld [vmem:[%s13 + $0x4] sm:$0xf]
        %v1721 = vld [vmem:[%s13 + $0x8] sm:$0xf]
        %v1722 = vld [vmem:[%s13 + $0xc] sm:$0xf]
        %v1723 = vld [vmem:[%s13 + $0x10] sm:$0xf]
        %v1724 = vld [vmem:[%s13 + $0x14] sm:$0xf]
        %v1725 = vld [vmem:[%s13 + $0x18] sm:$0xf]
        %v1726 = vld [vmem:[%s13 + $0x1c] sm:$0xf]
        %v1727 = vld [vmem:[%s14] sm:$0x1]
        %v1729 = vlaneseq
        %v1730 = vshrl.u32 %v1729, 7
        %v1731 = vsub.s32 0, %v1730
        %v1732 = vrot.slane %v1727, %v1731
        %v1742 = vunpack.c.l.b16 %v1719
        %v1743 = vunpack.c.l.b16 %v1720
        %v1744 = vunpack.c.l.b16 %v1721
        %v1745 = vunpack.c.l.b16 %v1722
        %v1746 = vunpack.c.l.b16 %v1723
        %v1747 = vunpack.c.l.b16 %v1724
        %v1748 = vunpack.c.l.b16 %v1725
        %v1749 = vunpack.c.l.b16 %v1726
        %v1750 = vpack.c.b16 %v1743, %v1742
        %v1751 = vpack.c.b16 %v1745, %v1744
        %v1752 = vpack.c.b16 %v1747, %v1746
        %v1753 = vpack.c.b16 %v1749, %v1748
        %vm1758 = vcmask 523264
        %v1760 = vsel %vm1758, %v1718, 0
        %1762 = vmatprep.subr.bf16.mxu0 0
        %1763 = vmatpush1.bf16.msra.mxu0 0
        %1764 = vmatprep.subr.bf16.mxu0 0
        %1765 = vmatpush1.bf16.msra.mxu0 0
        %1766 = vmatprep.subr.bf16.mxu0 0
        %1767 = vmatpush1.bf16.msra.mxu0 0
        %1768 = vmatprep.subr.bf16.mxu0 0
        %1769 = vmatpush1.bf16.msra.mxu0 0
        %1770 = vmatprep.subr.bf16.mxu0 0
        %1771 = vmatpush1.bf16.msra.mxu0 %v1753
        %1772 = vmatprep.subr.bf16.mxu0 0
        %1773 = vmatpush1.bf16.msra.mxu0 %v1752
        %1774 = vmatprep.subr.bf16.mxu0 0
        %1775 = vmatpush1.bf16.msra.mxu0 %v1751
        %1776 = vmatprep.subr.bf16.mxu0 0
        %1777 = vmatpush1.bf16.msra.mxu0 %v1750
        %1778 = vmatprep.subr.bf16.mxu0 0
        %1779 = vmatpush2.bf16.msra.mxu0 0
        %1780 = vmatprep.subr.bf16.mxu0 0
        %1781 = vmatpush2.bf16.msra.mxu0 0
        %1782 = vmatprep.subr.bf16.mxu0 0
        %1783 = vmatpush2.bf16.msra.mxu0 0
        %1784 = vmatprep.subr.bf16.mxu0 0
        %1785 = vmatpush2.bf16.msra.mxu0 0
        %1786 = vmatprep.subr.bf16.mxu0 0
        %1787 = vmatpush2.bf16.msra.mxu0 0
        %1788 = vmatprep.subr.bf16.mxu0 0
        %1789 = vmatpush2.bf16.msra.mxu0 0
        %1790 = vmatprep.subr.bf16.mxu0 0
        %1791 = vmatpush2.bf16.msra.mxu0 0
        %1792 = vmatprep.subr.bf16.mxu0 0
        %1793 = vmatpush2.bf16.msra.mxu0 0
        %1794 = vmatprep.mubr.bf16.mxu0 0
        %1795 = vmatmul.mubr.bf16.gmra.mxu0 %v1760
        %v1796 = vpop.f32.mrf.mxu0
        %v1797 = vadd.f32 %v1732, %v1796
        %v1798 = vpop.f32.mrf.mxu0
        %v1799 = vpop.f32.mrf.mxu0
        %v1800 = vadd.f32 %v1732, %v1799
        %v1801 = vpop.f32.mrf.mxu0
        %1802 = vdwg.mxu0
        %v1803 = vadd.f32 %v1601, %v1797
        %v1804 = vadd.f32 %v1602, %v1800
        %v1805 = vmul.f32 %v1803, %v651
        %v1806 = vmul.f32 %v1804, %v656
        %1807 = vst.msk [vmem:[%s628] sm:$0xff] %vm680, %v1805
        %1808 = vst.msk [vmem:[%s628 + $0x8] sm:$0xff] %vm680, %v1806
        %s1809 = sand.u32 %s384, 1
        %s1810 = scalar_lea.sflag [#allocation4], %s1809
        %s1811 = sand.u32 %s384, 1
        %s1812 = smul.addr %s1811, 16
        %s1813 = scalar_lea.vmem [#allocation11], %s1812
        // Predicated region
        $region101: #{tpu_custom_call.1} parent=79 // pred_check
          %p1814 = pneg %p394
        $region102: #{tpu_custom_call.1} parent=79 // pred_check_branch
          %1816 = sbr.rel (%p1814) target = $region104
        $region103: #{tpu_custom_call.1} parent=79 // pred_region
          %s1818 = ssub.s32 256, 256
          %1819 = vsyncadd %s1810, %s1818
          %s1820 = smul.addr %s36, 2
          %s1821 = smul.addr %s1820, 128
          %s1822 = scalar_lea.hbm %s15, %s1821
          %s1823 = sshll.u32 %s1813, 4
          %s1824 = int_to_ptr.vmem [resolvable:$true] %s1823
          %1829 = dma.vmem_to_hbm [thread:$0]  %s1824, 256, %s1822, %s1810, 128, 128, 8
        $region104: #{tpu_custom_call.1} parent=79 // pred_fallthru
          _
      $region80: #{tpu_custom_call.1} parent=5 // pred_fallthru
        _
      %p1830 = scmp.le.s32.totalorder 2, %s31
      // Predicated region
      $region105: #{tpu_custom_call.1} parent=5 // pred_check
        %p1831 = pneg %p1830
      $region106: #{tpu_custom_call.1} parent=5 // pred_check_branch
        %1833 = sbr.rel (%p1831) target = $region108
      $region107: #{tpu_custom_call.1} parent=5 // pred_region
        %s1834 = ssub.s32 %s31, 2
        // Predicated region
        $region109: #{tpu_custom_call.1} parent=107 // pred_check
          %p1835 = pneg %p400
        $region110: #{tpu_custom_call.1} parent=107 // pred_check_branch
          %1837 = sbr.rel (%p1835) target = $region112
        $region111: #{tpu_custom_call.1} parent=107 // pred_region
          %s1838 = sand.u32 %s385, 1
          %s1839 = scalar_lea.sflag [#allocation4], %s1838
          %s1840 = sand.u32 %s385, 1
          %s1841 = smul.addr %s1840, 16
          %s1842 = scalar_lea.vmem [#allocation11], %s1841
          %1843 = dma.done %s1839, 256
        $region112: #{tpu_custom_call.1} parent=107 // pred_fallthru
          _
      $region108: #{tpu_custom_call.1} parent=5 // pred_fallthru
        _
    $region6: #{tpu_custom_call.1} parent=1 // loop_footer
      %s35 = sadd.s32 1, %s31
    $region7: #{tpu_custom_call.1} parent=1 // loop_footer_branch
      %30 = sbr.rel target = $region3
    $region8: #{tpu_custom_call.1} parent=1 // loop_exit
      _
    %1844 = vsyncpa [#allocation3], 1
    %s1845 = scalar_lea.sflag [#allocation3], 1
    %1846 = vsyncpa %s1845, 1
    %1847 = vsyncpa [#allocation6], 1
    %s1848 = scalar_lea.sflag [#allocation6], 1
    %1849 = vsyncpa %s1848, 1
    %1850 = vsyncpa [#allocation9], 1
    %1851 = vsyncpa [#allocation4], 1
    %s1852 = scalar_lea.sflag [#allocation4], 1
    %1853 = vsyncpa %s1852, 1

</llo_original>
